<compile_context>
chip_gen: v7x
topology: tpu7x:2x2x1
jax: 0.10.0
libtpu: 0.0.40
codegen_flags: <defaults>
</compile_context>

<pallas_src>
import jax
import jax.numpy as jnp
import numpy as np
from jax.experimental import pallas as pl
from jax.experimental.pallas import tpu as pltpu


def _round_up(x, m):
    return (x + m - 1) // m * m


def softdot_kernel(h_ref, ctx_ref, mask_ref, w_in_t_ref, w_out_ctx_t_ref,
                   w_out_h_t_ref, h_tilde_ref, attn_ref):
    h = h_ref[...]                      # (TB, Dq) f32
    ctx = ctx_ref[...]                  # (TB, S, Dc) bf16 (or f32), streamed as-is
    mask = mask_ref[...]                # (TB, S) f32, nonzero == masked
    h_b = h.astype(jnp.bfloat16)

    # target = linear_in(h): small bf16 MXU dot, f32 accumulation.
    target = jnp.dot(h_b, w_in_t_ref[...], preferred_element_type=jnp.float32)  # (TB, Dc)

    # scores[b, s] = <ctx[b, s, :], target[b, :]>
    # VPU multiply (ctx promoted to f32 per-vreg) + lane-dim reduce; avoids the
    # degenerate q=1 batched MXU matvec.
    scores = jnp.sum(ctx * target[:, None, :], axis=-1)                          # (TB, S) f32

    # masked_fill_(mask, -inf) -- same semantics as the module (fully-masked row -> NaN).
    scores = jnp.where(mask > 0, -jnp.inf, scores)

    # Softmax over seq_len with exact normalization (attn is an exported output).
    m = jnp.max(scores, axis=-1, keepdims=True)
    e = jnp.exp(scores - m)
    attn = e / jnp.sum(e, axis=-1, keepdims=True)
    attn_ref[...] = attn

    # weighted[b, :] = sum_s attn[b, s] * ctx[b, s, :]  (VPU multiply + sublane reduce).
    weighted = jnp.sum(attn[:, :, None] * ctx, axis=1)                           # (TB, Dc) f32

    # h_tilde = tanh(linear_out(cat(weighted, h))) without materializing the concat:
    # split the K dimension into two accumulating bf16 MXU dots.
    pre = (jnp.dot(weighted.astype(jnp.bfloat16), w_out_ctx_t_ref[...],
                   preferred_element_type=jnp.float32)
           + jnp.dot(h_b, w_out_h_t_ref[...], preferred_element_type=jnp.float32))
    h_tilde_ref[...] = jnp.tanh(pre)
    # NOTE: with S << 128 the scores/attn vregs are lane-sparse; a lane-dense (S, tb)
    # layout is a possible further (secondary) optimization.


def _vmem_capacity_bytes():
    """Per-core physical VMEM; safe 64 MiB (v7x) fallback if the query is unavailable."""
    try:
        info = pltpu.get_tpu_info()
        cap = int(getattr(info, "vmem_capacity_bytes", 64 << 20))
        return cap if cap > 0 else (64 << 20)
    except Exception:
        return 64 << 20


def _per_row_bytes(S, Dc, Dq, ctx_itemsize):
    """VMEM bytes one batch row costs per grid step: double-buffered streamed blocks
    plus an allowance for the transient f32 products of the two VPU contractions."""
    return (2 * (S * Dc * ctx_itemsize + S * 4 + Dq * 4)   # streamed inputs  x2 buffers
            + 2 * (S * 4 + Dq * 4)                          # streamed outputs x2 buffers
            + 2 * S * Dc * 4)                               # transient f32 products


def _pick_batch_tile(B, S, Dc, Dq, ctx_itemsize, vmem_budget):
    per_row = _per_row_bytes(S, Dc, Dq, ctx_itemsize)
    tb = max(8, (vmem_budget // max(per_row, 1)) // 8 * 8)
    if B > 8:  # keep >= 2 grid steps so both v7x TensorCores get work (harmless elsewhere)
        tb = min(tb, _round_up(pl.cdiv(B, 2), 8))
    tb = min(tb, _round_up(B, 8))
    return int(tb)


def soft_dot_attention(h, context, mask, w_in, w_out, *, batch_tile=None):
    """SoftDotAttention forward (output_tilde=True, output_prob=True).

    h: (B, Dq), context: (B, S, Dc), mask: (B, S) nonzero == masked.
    w_in:  (Dc, Dq)      == linear_in.weight
    w_out: (Dq, Dq + Dc) == linear_out.weight (columns: [weighted_context ; h]).
    context is streamed in the dtype it arrives in (pass bf16 upstream for the
    bandwidth-bound fast path); all math accumulates in f32.
    Returns (h_tilde (B, Dq) f32, attn (B, S) f32).
    """
    B, Dq = h.shape
    _, S, Dc = context.shape

    h = h.astype(jnp.float32)
    mask = mask.astype(jnp.float32)
    # Weights are VMEM-resident for the whole grid; store bf16 (MXU-native, half VMEM).
    w_in_t = jnp.asarray(w_in).T.astype(jnp.bfloat16)            # (Dq, Dc)
    w_out = jnp.asarray(w_out)
    w_out_ctx_t = w_out[:, :Dc].T.astype(jnp.bfloat16)           # (Dc, Dq)
    w_out_h_t = w_out[:, Dc:].T.astype(jnp.bfloat16)             # (Dq, Dq)

    ctx_itemsize = jnp.dtype(context.dtype).itemsize
    cap = _vmem_capacity_bytes()
    budget = (min(cap, 128 << 20) * 3) // 4    # ~48 MiB on v7x, ~96 MiB on v5e/v6e

    tb = int(batch_tile) if batch_tile is not None else _pick_batch_tile(
        B, S, Dc, Dq, ctx_itemsize, budget)
    grid = (pl.cdiv(B, tb),)   # ragged last block handled by Pallas -> no HBM pad pass

    # VMEM limit derived from the same per-row formula as the tile pick (consistent
    # budget; raises v5e's 16 MiB scoped default, stays under v7x's 64 MiB).
    weights_bytes = 2 * (Dq * Dc + Dc * Dq + Dq * Dq) * 2        # 2 buffers, bf16
    need = tb * _per_row_bytes(S, Dc, Dq, ctx_itemsize) + weights_bytes + (4 << 20)
    vmem_limit = int(min(max(need, 16 << 20), cap - (2 << 20)))

    h_tilde, attn = pl.pallas_call(
        softdot_kernel,
        out_shape=(jax.ShapeDtypeStruct((B, Dq), jnp.float32),
                   jax.ShapeDtypeStruct((B, S), jnp.float32)),
        grid_spec=pltpu.PrefetchScalarGridSpec(
            num_scalar_prefetch=0,
            grid=grid,
            in_specs=[
                pl.BlockSpec((tb, Dq), lambda b: (b, 0)),         # h         (streamed)
                pl.BlockSpec((tb, S, Dc), lambda b: (b, 0, 0)),   # context   (streamed)
                pl.BlockSpec((tb, S), lambda b: (b, 0)),          # mask      (streamed)
                pl.BlockSpec((Dq, Dc), lambda b: (0, 0)),         # w_in_t    (resident)
                pl.BlockSpec((Dc, Dq), lambda b: (0, 0)),         # w_out_ctx_t (resident)
                pl.BlockSpec((Dq, Dq), lambda b: (0, 0)),         # w_out_h_t (resident)
            ],
            out_specs=(
                pl.BlockSpec((tb, Dq), lambda b: (b, 0)),         # h_tilde
                pl.BlockSpec((tb, S), lambda b: (b, 0)),          # attn
            ),
        ),
        compiler_params=pltpu.CompilerParams(
            dimension_semantics=("parallel",),   # megacore shard on v7x; no-op on v5e/v6e
            vmem_limit_bytes=vmem_limit,
        ),
    )(h, context, mask, w_in_t, w_out_ctx_t, w_out_h_t)
    return h_tilde, attn


def _bf16_rt(x):
    return jnp.asarray(x).astype(jnp.bfloat16).astype(jnp.float32)


def reference(h, context, mask, w_in, w_out):
    """Pure-JAX f32 reference of SoftDotAttention.forward (default flag path)."""
    hp = jax.lax.Precision.HIGHEST
    target = jnp.dot(h, w_in.T, precision=hp)                         # (B, Dc)
    scores = jnp.einsum('bsd,bd->bs', context, target, precision=hp)  # (B, S)
    scores = jnp.where(mask > 0, -jnp.inf, scores)
    attn = jax.nn.softmax(scores, axis=-1)
    weighted = jnp.einsum('bs,bsd->bd', attn, context, precision=hp)  # (B, Dc)
    h_tilde = jnp.tanh(jnp.dot(jnp.concatenate([weighted, h], axis=1),
                               w_out.T, precision=hp))
    return h_tilde, attn


if __name__ == "__main__":
    # Small, deterministic example (R2R-flavored, scaled down).
    B, S, Dq, Dc = 20, 24, 32, 64   # B=20 exercises the ragged last batch block

    key = jax.random.PRNGKey(0)
    k_h, k_ctx, k_win, k_wout = jax.random.split(key, 4)

    h = 0.5 * jax.random.normal(k_h, (B, Dq), dtype=jnp.float32)
    # Context arrives as bf16 (recommended streaming dtype); the wrapper performs no
    # extra full-HBM cast or pad pass over it.
    context = (0.5 * jax.random.normal(k_ctx, (B, S, Dc), dtype=jnp.float32)
               ).astype(jnp.bfloat16)

    # Deterministic nn.Linear-style parameter init (no checkpoint load).
    w_in = jax.random.uniform(k_win, (Dc, Dq), minval=-1.0, maxval=1.0) / np.sqrt(Dq)
    w_out = jax.random.uniform(k_wout, (Dq, Dq + Dc), minval=-1.0, maxval=1.0) / np.sqrt(Dq + Dc)

    # Mask the last two positions of every row (>= 1 position stays unmasked).
    mask = jnp.zeros((B, S), dtype=jnp.float32).at[:, -2:].set(1.0)

    h_tilde, attn = soft_dot_attention(h, context, mask, w_in, w_out)
    jax.block_until_ready((h_tilde, attn))

    ctx_f32 = context.astype(jnp.float32)

    # (1) Tight check against a reference fed exactly what the kernel consumes
    #     (bf16-rounded h / weights, the bf16 context, f32 math).
    ref_ht_q, ref_attn_q = reference(_bf16_rt(h), ctx_f32, mask,
                                     _bf16_rt(w_in), _bf16_rt(w_out))
    np.testing.assert_allclose(np.asarray(attn), np.asarray(ref_attn_q),
                               rtol=1e-3, atol=1e-3)
    np.testing.assert_allclose(np.asarray(h_tilde), np.asarray(ref_ht_q),
                               rtol=1e-3, atol=3e-3)

    # (2) Looser check against unquantized f32 module math (bounds the total error
    #     from bf16 weight storage / bf16 MXU inputs).
    ref_ht, ref_attn = reference(h, ctx_f32, mask, w_in, w_out)
    np.testing.assert_allclose(np.asarray(attn), np.asarray(ref_attn),
                               rtol=0.0, atol=2.5e-2)
    np.testing.assert_allclose(np.asarray(h_tilde), np.asarray(ref_ht),
                               rtol=0.0, atol=2.5e-2)

    print("KERNEL_OK")
</pallas_src>

<mosaic_0001>
module attributes {stable_mosaic.version = 11 : i64} {
  func.func @softdot_kernel(%arg0: i32, %arg1: memref<16x32xf32, #tpu.memory_space<vmem>>, %arg2: memref<16x24x64xbf16, #tpu.memory_space<vmem>>, %arg3: memref<16x24xf32, #tpu.memory_space<vmem>>, %arg4: memref<32x64xbf16, #tpu.memory_space<vmem>>, %arg5: memref<64x32xbf16, #tpu.memory_space<vmem>>, %arg6: memref<32x32xbf16, #tpu.memory_space<vmem>>, %arg7: memref<16x32xf32, #tpu.memory_space<vmem>>, %arg8: memref<16x24xf32, #tpu.memory_space<vmem>>) attributes {dimension_semantics = [#tpu.dimension_semantics<parallel>], iteration_bounds = array<i64: 2>, scalar_prefetch = 0 : i64, scratch_operands = 0 : i64, tpu.core_type = #tpu.core_type<tc>, window_params = [{transform_indices = @transform_0, window_bounds = array<i64: 16, 32>}, {transform_indices = @transform_1, window_bounds = array<i64: 16, 24, 64>}, {transform_indices = @transform_2, window_bounds = array<i64: 16, 24>}, {pipeline_mode = #tpu.pipeline_mode<synchronous>, transform_indices = @transform_3, window_bounds = array<i64: 32, 64>}, {pipeline_mode = #tpu.pipeline_mode<synchronous>, transform_indices = @transform_4, window_bounds = array<i64: 64, 32>}, {pipeline_mode = #tpu.pipeline_mode<synchronous>, transform_indices = @transform_5, window_bounds = array<i64: 32, 32>}, {transform_indices = @transform_6, window_bounds = array<i64: 16, 32>}, {transform_indices = @transform_7, window_bounds = array<i64: 16, 24>}]} {
    %c0 = arith.constant 0 : index
    %c0_0 = arith.constant 0 : index
    %0 = vector.load %arg1[%c0, %c0_0] : memref<16x32xf32, #tpu.memory_space<vmem>>, vector<16x32xf32>
    %c0_1 = arith.constant 0 : index
    %c0_2 = arith.constant 0 : index
    %c0_3 = arith.constant 0 : index
    %1 = vector.load %arg2[%c0_1, %c0_2, %c0_3] : memref<16x24x64xbf16, #tpu.memory_space<vmem>>, vector<16x24x64xbf16>
    %c0_4 = arith.constant 0 : index
    %c0_5 = arith.constant 0 : index
    %2 = vector.load %arg3[%c0_4, %c0_5] : memref<16x24xf32, #tpu.memory_space<vmem>>, vector<16x24xf32>
    %3 = arith.truncf %0 : vector<16x32xf32> to vector<16x32xbf16>
    %c0_6 = arith.constant 0 : index
    %c0_7 = arith.constant 0 : index
    %4 = vector.load %arg4[%c0_6, %c0_7] : memref<32x64xbf16, #tpu.memory_space<vmem>>, vector<32x64xbf16>
    %cst = arith.constant dense<0.000000e+00> : vector<16x64xf32>
    %5 = tpu.matmul %3, %4, %cst {dimension_numbers = #tpu.dot_dimension_numbers<[1], [0], [0], [1], [0, 0, 1, 1], [], []>} : vector<16x32xbf16>, vector<32x64xbf16>, vector<16x64xf32> -> vector<16x64xf32>
    %6 = vector.shape_cast %5 : vector<16x64xf32> to vector<16x1x64xf32>
    %7 = arith.extf %1 : vector<16x24x64xbf16> to vector<16x24x64xf32>
    %8 = vector.broadcast %6 : vector<16x1x64xf32> to vector<16x24x64xf32>
    %9 = arith.mulf %7, %8 : vector<16x24x64xf32>
    %cst_8 = arith.constant dense<0.000000e+00> : vector<16x24xf32>
    %10 = vector.multi_reduction <add>, %9, %cst_8 [2] : vector<16x24x64xf32> to vector<16x24xf32>
    %cst_9 = arith.constant 0.000000e+00 : f32
    %11 = vector.broadcast %cst_9 : f32 to vector<16x24xf32>
    %12 = arith.cmpf ogt, %2, %11 : vector<16x24xf32>
    %cst_10 = arith.constant 0xFF800000 : f32
    %13 = vector.broadcast %cst_10 : f32 to vector<16x24xf32>
    %14 = arith.select %12, %13, %10 : vector<16x24xi1>, vector<16x24xf32>
    %cst_11 = arith.constant dense<0xFF800000> : vector<16xf32>
    %15 = vector.multi_reduction <maximumf>, %14, %cst_11 [1] : vector<16x24xf32> to vector<16xf32>
    %16 = vector.shape_cast %15 : vector<16xf32> to vector<16x1xf32>
    %17 = vector.broadcast %16 : vector<16x1xf32> to vector<16x24xf32>
    %18 = arith.subf %14, %17 : vector<16x24xf32>
    %19 = math.exp %18 : vector<16x24xf32>
    %cst_12 = arith.constant dense<0.000000e+00> : vector<16xf32>
    %20 = vector.multi_reduction <add>, %19, %cst_12 [1] : vector<16x24xf32> to vector<16xf32>
    %21 = vector.shape_cast %20 : vector<16xf32> to vector<16x1xf32>
    %22 = vector.broadcast %21 : vector<16x1xf32> to vector<16x24xf32>
    %23 = arith.divf %19, %22 : vector<16x24xf32>
    %c0_13 = arith.constant 0 : index
    %c0_14 = arith.constant 0 : index
    %24 = vector.load %arg8[%c0_13, %c0_14] : memref<16x24xf32, #tpu.memory_space<vmem>>, vector<16x24xf32>
    tpu.vector_store %arg8[%c0_13, %c0_14], %23 {strides = array<i32>} : memref<16x24xf32, #tpu.memory_space<vmem>>, vector<16x24xf32>,
    %25 = vector.shape_cast %23 : vector<16x24xf32> to vector<16x24x1xf32>
    %26 = arith.extf %1 : vector<16x24x64xbf16> to vector<16x24x64xf32>
    %27 = vector.broadcast %25 : vector<16x24x1xf32> to vector<16x24x64xf32>
    %28 = arith.mulf %27, %26 : vector<16x24x64xf32>
    %cst_15 = arith.constant dense<0.000000e+00> : vector<16x64xf32>
    %29 = vector.multi_reduction <add>, %28, %cst_15 [1] : vector<16x24x64xf32> to vector<16x64xf32>
    %30 = arith.truncf %29 : vector<16x64xf32> to vector<16x64xbf16>
    %c0_16 = arith.constant 0 : index
    %c0_17 = arith.constant 0 : index
    %31 = vector.load %arg5[%c0_16, %c0_17] : memref<64x32xbf16, #tpu.memory_space<vmem>>, vector<64x32xbf16>
    %cst_18 = arith.constant dense<0.000000e+00> : vector<16x32xf32>
    %32 = tpu.matmul %30, %31, %cst_18 {dimension_numbers = #tpu.dot_dimension_numbers<[1], [0], [0], [1], [0, 0, 1, 1], [], []>} : vector<16x64xbf16>, vector<64x32xbf16>, vector<16x32xf32> -> vector<16x32xf32>
    %c0_19 = arith.constant 0 : index
    %c0_20 = arith.constant 0 : index
    %33 = vector.load %arg6[%c0_19, %c0_20] : memref<32x32xbf16, #tpu.memory_space<vmem>>, vector<32x32xbf16>
    %cst_21 = arith.constant dense<0.000000e+00> : vector<16x32xf32>
    %34 = tpu.matmul %3, %33, %cst_21 {dimension_numbers = #tpu.dot_dimension_numbers<[1], [0], [0], [1], [0, 0, 1, 1], [], []>} : vector<16x32xbf16>, vector<32x32xbf16>, vector<16x32xf32> -> vector<16x32xf32>
    %35 = arith.addf %32, %34 : vector<16x32xf32>
    %36 = math.tanh %35 : vector<16x32xf32>
    %c0_22 = arith.constant 0 : index
    %c0_23 = arith.constant 0 : index
    %37 = vector.load %arg7[%c0_22, %c0_23] : memref<16x32xf32, #tpu.memory_space<vmem>>, vector<16x32xf32>
    tpu.vector_store %arg7[%c0_22, %c0_23], %36 {strides = array<i32>} : memref<16x32xf32, #tpu.memory_space<vmem>>, vector<16x32xf32>,
    return
  }
  func.func @transform_0(%arg0: i32) -> (i32, i32) {
    %c0_i32 = arith.constant 0 : i32
    %c0_i32_0 = arith.constant 0 : i32
    return %arg0, %c0_i32 : i32, i32
  }
  func.func @transform_1(%arg0: i32) -> (i32, i32, i32) {
    %c0_i32 = arith.constant 0 : i32
    %c0_i32_0 = arith.constant 0 : i32
    %c0_i32_1 = arith.constant 0 : i32
    return %arg0, %c0_i32, %c0_i32_0 : i32, i32, i32
  }
  func.func @transform_2(%arg0: i32) -> (i32, i32) {
    %c0_i32 = arith.constant 0 : i32
    %c0_i32_0 = arith.constant 0 : i32
    return %arg0, %c0_i32 : i32, i32
  }
  func.func @transform_3(%arg0: i32) -> (i32, i32) {
    %c0_i32 = arith.constant 0 : i32
    %c0_i32_0 = arith.constant 0 : i32
    %c0_i32_1 = arith.constant 0 : i32
    return %c0_i32, %c0_i32_0 : i32, i32
  }
  func.func @transform_4(%arg0: i32) -> (i32, i32) {
    %c0_i32 = arith.constant 0 : i32
    %c0_i32_0 = arith.constant 0 : i32
    %c0_i32_1 = arith.constant 0 : i32
    return %c0_i32, %c0_i32_0 : i32, i32
  }
  func.func @transform_5(%arg0: i32) -> (i32, i32) {
    %c0_i32 = arith.constant 0 : i32
    %c0_i32_0 = arith.constant 0 : i32
    %c0_i32_1 = arith.constant 0 : i32
    return %c0_i32, %c0_i32_0 : i32, i32
  }
  func.func @transform_6(%arg0: i32) -> (i32, i32) {
    %c0_i32 = arith.constant 0 : i32
    %c0_i32_0 = arith.constant 0 : i32
    return %arg0, %c0_i32 : i32, i32
  }
  func.func @transform_7(%arg0: i32) -> (i32, i32) {
    %c0_i32 = arith.constant 0 : i32
    %c0_i32_0 = arith.constant 0 : i32
    return %arg0, %c0_i32 : i32, i32
  }
}

</mosaic_0001>

<llo_original>
// kernel: tpu_custom_call.1
$region0: #{tpu_custom_call.1}
  #allocation0 [shape = 'u32[]', space=smem, size = 0x4, offset = 0x4, fixed_abs, tag = 'smem constant byte address 0x4 - core index']
  #allocation1 [shape = 'u32[144,128]{1,0:T(1,128)}', space=vmem, size = 0x12000, scoped, tag = 'internal scratch']
  %s0 = inlined_call_operand.vmem [shape: f32[20,32], index: 0, kind: input, shape index: {}]
  %s1 = inlined_call_operand.hbm [shape: bf16[20,24,64], index: 1, kind: input, shape index: {}]
  %s2 = inlined_call_operand.vmem [shape: f32[20,24], index: 2, kind: input, shape index: {}]
  %s3 = inlined_call_operand.hbm [shape: bf16[32,64], index: 3, kind: input, shape index: {}]
  %s4 = inlined_call_operand.vmem [shape: bf16[64,32], index: 4, kind: input, shape index: {}]
  %s5 = inlined_call_operand.vmem [shape: bf16[32,32], index: 5, kind: input, shape index: {}]
  %s6 = inlined_call_operand.hbm [shape: f32[20,32], index: 6, kind: output, shape index: {0}]
  %s7 = inlined_call_operand.hbm [shape: f32[20,24], index: 7, kind: output, shape index: {1}]
  %8 = xla_tuple %s6, %s7
  %s9 = sld [smem:[#allocation0]]
  $region73: #{tpu_custom_call.1} parent=0
    _
  %s11 = ssub.s32 1, %s9
  %s12 = scalar_select 0, %s11, %s9
  $region1: #{tpu_custom_call.1} parent=0
    #allocation2 [shape = 'u8[196608]{0}', space=vmem, size = 0x30000, scoped, tag = 'input window, operand 1']
    #allocation3 [shape = 's32[2]{0}', space=sflag, size = 0x8, scoped, tag = 'scoped memory for tpu_custom_call.1']
    #allocation4 [shape = 's32[2]{0}', space=sflag, size = 0x8, scoped, tag = 'scoped memory for tpu_custom_call.1']
    #allocation5 [shape = 'u8[8192]{0}', space=vmem, size = 0x2000, scoped, tag = 'input window, operand 3, single buffered']
    #allocation6 [shape = 's32[1]{0}', space=sflag, size = 0x4, scoped, tag = 'scoped memory for tpu_custom_call.1']
    #allocation7 [shape = 'u8[16384]{0}', space=vmem, size = 0x4000, scoped, tag = 'output window, operand 0']
    #allocation8 [shape = 'u8[16384]{0}', space=vmem, size = 0x4000, scoped, tag = 'output window, operand 1']
    #allocation9 [shape = 's32[2]{0}', space=sflag, size = 0x8, scoped, tag = 'scoped memory for tpu_custom_call.1']
    %13 = vsyncpa [#allocation3], 0
    %s14 = scalar_lea.sflag [#allocation3], 1
    %15 = vsyncpa %s14, 0
    %16 = vsyncpa [#allocation6], 0
    %17 = vsyncpa [#allocation4], 0
    %s18 = scalar_lea.sflag [#allocation4], 1
    %19 = vsyncpa %s18, 0
    %20 = vsyncpa [#allocation9], 0
    %s21 = scalar_lea.sflag [#allocation9], 1
    %22 = vsyncpa %s21, 0
    loop: start=0, step=1, limit=4
    $region2: #{tpu_custom_call.1} parent=1 // loop_pre_header
      _
    $region3: #{tpu_custom_call.1} parent=1 // loop_header
      %s24 = sphi 0, %s28
      %p25 = scmp.ge.s32.totalorder %s24, 4
      %s34 = sphi 0, %s36
      %s37 = sphi 0, %s34
      %s38 = sphi 0, %s37
      %s54 = sphi 0, %s38
      %s60 = sphi 0, %s62
      %s63 = sphi 0, %s60
      %s64 = sphi 0, %s63
      %s80 = sphi 0, %s64
      %s86 = sphi 0, %s88
      %s89 = sphi 0, %s86
      %s90 = sphi 0, %s89
      %s106 = sphi 0, %s90
      %s110 = sphi 0, %s110
      %s112 = sphi 0, %s110
      %s113 = sphi 0, %s112
      %s127 = sphi 0, %s113
      %s131 = sphi 0, %s131
      %s133 = sphi 0, %s131
      %s134 = sphi 0, %s133
      %s148 = sphi 0, %s134
      %s152 = sphi 0, %s152
      %s154 = sphi 0, %s152
      %s155 = sphi 0, %s154
      %s169 = sphi 0, %s155
      %s175 = sphi 0, %s177
      %s178 = sphi 0, %s175
      %s179 = sphi 0, %s178
      %s195 = sphi 0, %s179
      %s201 = sphi 0, %s203
      %s204 = sphi 0, %s201
      %s205 = sphi 0, %s204
      %s221 = sphi 0, %s205
    $region4: #{tpu_custom_call.1} parent=1 // loop_header_branch
      %27 = sbr.rel (%p25) target = $region8
    $region5: #{tpu_custom_call.1} parent=1 // loop_body
      %s29 = ssub.s32 %s24, 1
      %s30 = ssub.s32 %s24, 2
      %s31 = sadd.s32 %s24, 1
      %s32 = ssub.s32 %s24, %s31
      %p33 = scmp.eq.s32.totalorder %s32, 0
      %s35 = sadd.s32 %s34, 1
      %s36 = scalar_select %p33, %s34, %s35
      %p39 = pneg %p33
      %p40 = scmp.eq.s32.totalorder %s24, 1
      %p41 = por %p39, %p40
      %p42 = scmp.ne.s32.totalorder %s34, %s37
      %p43 = scmp.eq.s32.totalorder %s24, 0
      %p44 = por %p42, %p43
      %p45 = scmp.ne.s32.totalorder %s34, %s37
      %p46 = scmp.eq.s32.totalorder %s29, 1
      %p47 = por %p45, %p46
      %p48 = scmp.ne.s32.totalorder %s37, %s38
      %p49 = scmp.eq.s32.totalorder %s29, 0
      %p50 = por %p48, %p49
      %p51 = scmp.ne.s32.totalorder %s37, %s38
      %p52 = scmp.eq.s32.totalorder %s30, 1
      %p53 = por %p51, %p52
      %p55 = scmp.ne.s32.totalorder %s38, %s54
      %p56 = scmp.eq.s32.totalorder %s30, 0
      %p57 = por %p55, %p56
      %s58 = ssub.s32 %s24, %s31
      %p59 = scmp.eq.s32.totalorder %s58, 0
      %s61 = sadd.s32 %s60, 1
      %s62 = scalar_select %p59, %s60, %s61
      %p65 = pneg %p59
      %p66 = scmp.eq.s32.totalorder %s24, 1
      %p67 = por %p65, %p66
      %p68 = scmp.ne.s32.totalorder %s60, %s63
      %p69 = scmp.eq.s32.totalorder %s24, 0
      %p70 = por %p68, %p69
      %p71 = scmp.ne.s32.totalorder %s60, %s63
      %p72 = scmp.eq.s32.totalorder %s29, 1
      %p73 = por %p71, %p72
      %p74 = scmp.ne.s32.totalorder %s63, %s64
      %p75 = scmp.eq.s32.totalorder %s29, 0
      %p76 = por %p74, %p75
      %p77 = scmp.ne.s32.totalorder %s63, %s64
      %p78 = scmp.eq.s32.totalorder %s30, 1
      %p79 = por %p77, %p78
      %p81 = scmp.ne.s32.totalorder %s64, %s80
      %p82 = scmp.eq.s32.totalorder %s30, 0
      %p83 = por %p81, %p82
      %s84 = ssub.s32 %s24, %s31
      %p85 = scmp.eq.s32.totalorder %s84, 0
      %s87 = sadd.s32 %s86, 1
      %s88 = scalar_select %p85, %s86, %s87
      %p91 = pneg %p85
      %p92 = scmp.eq.s32.totalorder %s24, 1
      %p93 = por %p91, %p92
      %p94 = scmp.ne.s32.totalorder %s86, %s89
      %p95 = scmp.eq.s32.totalorder %s24, 0
      %p96 = por %p94, %p95
      %p97 = scmp.ne.s32.totalorder %s86, %s89
      %p98 = scmp.eq.s32.totalorder %s29, 1
      %p99 = por %p97, %p98
      %p100 = scmp.ne.s32.totalorder %s89, %s90
      %p101 = scmp.eq.s32.totalorder %s29, 0
      %p102 = por %p100, %p101
      %p103 = scmp.ne.s32.totalorder %s89, %s90
      %p104 = scmp.eq.s32.totalorder %s30, 1
      %p105 = por %p103, %p104
      %p107 = scmp.ne.s32.totalorder %s90, %s106
      %p108 = scmp.eq.s32.totalorder %s30, 0
      %p109 = por %p107, %p108
      %s111 = sadd.s32 %s110, 1
      %p114 = scmp.eq.s32.totalorder %s24, 1
      %p115 = scmp.ne.s32.totalorder %s110, %s112
      %p116 = scmp.eq.s32.totalorder %s24, 0
      %p117 = por %p115, %p116
      %p118 = scmp.ne.s32.totalorder %s110, %s112
      %p119 = scmp.eq.s32.totalorder %s29, 1
      %p120 = por %p118, %p119
      %p121 = scmp.ne.s32.totalorder %s112, %s113
      %p122 = scmp.eq.s32.totalorder %s29, 0
      %p123 = por %p121, %p122
      %p124 = scmp.ne.s32.totalorder %s112, %s113
      %p125 = scmp.eq.s32.totalorder %s30, 1
      %p126 = por %p124, %p125
      %p128 = scmp.ne.s32.totalorder %s113, %s127
      %p129 = scmp.eq.s32.totalorder %s30, 0
      %p130 = por %p128, %p129
      %s132 = sadd.s32 %s131, 1
      %p135 = scmp.eq.s32.totalorder %s24, 1
      %p136 = scmp.ne.s32.totalorder %s131, %s133
      %p137 = scmp.eq.s32.totalorder %s24, 0
      %p138 = por %p136, %p137
      %p139 = scmp.ne.s32.totalorder %s131, %s133
      %p140 = scmp.eq.s32.totalorder %s29, 1
      %p141 = por %p139, %p140
      %p142 = scmp.ne.s32.totalorder %s133, %s134
      %p143 = scmp.eq.s32.totalorder %s29, 0
      %p144 = por %p142, %p143
      %p145 = scmp.ne.s32.totalorder %s133, %s134
      %p146 = scmp.eq.s32.totalorder %s30, 1
      %p147 = por %p145, %p146
      %p149 = scmp.ne.s32.totalorder %s134, %s148
      %p150 = scmp.eq.s32.totalorder %s30, 0
      %p151 = por %p149, %p150
      %s153 = sadd.s32 %s152, 1
      %p156 = scmp.eq.s32.totalorder %s24, 1
      %p157 = scmp.ne.s32.totalorder %s152, %s154
      %p158 = scmp.eq.s32.totalorder %s24, 0
      %p159 = por %p157, %p158
      %p160 = scmp.ne.s32.totalorder %s152, %s154
      %p161 = scmp.eq.s32.totalorder %s29, 1
      %p162 = por %p160, %p161
      %p163 = scmp.ne.s32.totalorder %s154, %s155
      %p164 = scmp.eq.s32.totalorder %s29, 0
      %p165 = por %p163, %p164
      %p166 = scmp.ne.s32.totalorder %s154, %s155
      %p167 = scmp.eq.s32.totalorder %s30, 1
      %p168 = por %p166, %p167
      %p170 = scmp.ne.s32.totalorder %s155, %s169
      %p171 = scmp.eq.s32.totalorder %s30, 0
      %p172 = por %p170, %p171
      %s173 = ssub.s32 %s24, %s31
      %p174 = scmp.eq.s32.totalorder %s173, 0
      %s176 = sadd.s32 %s175, 1
      %s177 = scalar_select %p174, %s175, %s176
      %p180 = pneg %p174
      %p181 = scmp.eq.s32.totalorder %s24, 1
      %p182 = por %p180, %p181
      %p183 = scmp.ne.s32.totalorder %s175, %s178
      %p184 = scmp.eq.s32.totalorder %s24, 0
      %p185 = por %p183, %p184
      %p186 = scmp.ne.s32.totalorder %s175, %s178
      %p187 = scmp.eq.s32.totalorder %s29, 1
      %p188 = por %p186, %p187
      %p189 = scmp.ne.s32.totalorder %s178, %s179
      %p190 = scmp.eq.s32.totalorder %s29, 0
      %p191 = por %p189, %p190
      %p192 = scmp.ne.s32.totalorder %s178, %s179
      %p193 = scmp.eq.s32.totalorder %s30, 1
      %p194 = por %p192, %p193
      %p196 = scmp.ne.s32.totalorder %s179, %s195
      %p197 = scmp.eq.s32.totalorder %s30, 0
      %p198 = por %p196, %p197
      %s199 = ssub.s32 %s24, %s31
      %p200 = scmp.eq.s32.totalorder %s199, 0
      %s202 = sadd.s32 %s201, 1
      %s203 = scalar_select %p200, %s201, %s202
      %p206 = pneg %p200
      %p207 = scmp.eq.s32.totalorder %s24, 1
      %p208 = por %p206, %p207
      %p209 = scmp.ne.s32.totalorder %s201, %s204
      %p210 = scmp.eq.s32.totalorder %s24, 0
      %p211 = por %p209, %p210
      %p212 = scmp.ne.s32.totalorder %s201, %s204
      %p213 = scmp.eq.s32.totalorder %s29, 1
      %p214 = por %p212, %p213
      %p215 = scmp.ne.s32.totalorder %s204, %s205
      %p216 = scmp.eq.s32.totalorder %s29, 0
      %p217 = por %p215, %p216
      %p218 = scmp.ne.s32.totalorder %s204, %s205
      %p219 = scmp.eq.s32.totalorder %s30, 1
      %p220 = por %p218, %p219
      %p222 = scmp.ne.s32.totalorder %s205, %s221
      %p223 = scmp.eq.s32.totalorder %s30, 0
      %p224 = por %p222, %p223
      %p225 = scmp.le.s32.totalorder 1, %s24
      %p226 = scmp.lt.s32.totalorder %s24, 3
      %p227 = pnand %p225, %p226
      %p228 = pneg %p227
      // Predicated region
      $region9: #{tpu_custom_call.1} parent=5 // pred_check
        _
      $region10: #{tpu_custom_call.1} parent=5 // pred_check_branch
        %230 = sbr.rel (%p227) target = $region12
      $region11: #{tpu_custom_call.1} parent=5 // pred_region
        %s231 = ssub.s32 %s24, 1
        // Predicated region
        $region13: #{tpu_custom_call.1} parent=11 // pred_check
          %p232 = pneg %p123
        $region14: #{tpu_custom_call.1} parent=11 // pred_check_branch
          %234 = sbr.rel (%p232) target = $region16
        $region15: #{tpu_custom_call.1} parent=11 // pred_region
          %s236 = ssub.s32 256, 256
          %237 = vsyncadd [#allocation6], %s236
          %s238 = sshll.u32 [#allocation5], 4
          %s239 = int_to_ptr.vmem [resolvable:$true] %s238
          %244 = dma.hbm_to_vmem [thread:$0]  %s3, 256, %s239, [#allocation6], 64, 64, 4
        $region16: #{tpu_custom_call.1} parent=11 // pred_fallthru
          _
        // Predicated region
        $region17: #{tpu_custom_call.1} parent=11 // pred_check
          %p245 = pneg %p144
        $region18: #{tpu_custom_call.1} parent=11 // pred_check_branch
          %247 = sbr.rel (%p245) target = $region20
        $region19: #{tpu_custom_call.1} parent=11 // pred_region
          _
        $region20: #{tpu_custom_call.1} parent=11 // pred_fallthru
          _
        // Predicated region
        $region21: #{tpu_custom_call.1} parent=11 // pred_check
          %p248 = pneg %p165
        $region22: #{tpu_custom_call.1} parent=11 // pred_check_branch
          %250 = sbr.rel (%p248) target = $region24
        $region23: #{tpu_custom_call.1} parent=11 // pred_region
          _
        $region24: #{tpu_custom_call.1} parent=11 // pred_fallthru
          _
      $region12: #{tpu_custom_call.1} parent=5 // pred_fallthru
        _
      %p251 = scmp.lt.s32.totalorder %s24, 2
      // Predicated region
      $region25: #{tpu_custom_call.1} parent=5 // pred_check
        %p252 = pneg %p251
      $region26: #{tpu_custom_call.1} parent=5 // pred_check_branch
        %254 = sbr.rel (%p252) target = $region28
      $region27: #{tpu_custom_call.1} parent=5 // pred_region
        // Predicated region
        $region29: #{tpu_custom_call.1} parent=27 // pred_check
          %p255 = pneg %p44
        $region30: #{tpu_custom_call.1} parent=27 // pred_check_branch
          %257 = sbr.rel (%p255) target = $region32
        $region31: #{tpu_custom_call.1} parent=27 // pred_region
          %s258 = smul.u32 2, %s24
          %s259 = ssub.s32 3, %s258
          %p260 = scmp.lt.s32.totalorder %s259, 2
          %s261 = scalar_select %p260, %s259, 2
          %s262 = smul.u32 128, %s261
          %p263 = scmp.lt.s32.totalorder %s258, 2
          %s264 = scalar_select %p263, %s258, 2
          %s265 = smul.addr %s264, 8
          %s266 = scalar_lea.vmem %s0, %s265
          %s267 = smul.u32 2, %s24
          %s268 = ssub.s32 3, %s267
          %p269 = scmp.lt.s32.totalorder %s268, 2
          %s270 = scalar_select %p269, %s268, 2
          %s271 = smul.u32 128, %s270
        $region32: #{tpu_custom_call.1} parent=27 // pred_fallthru
          _
        // Predicated region
        $region33: #{tpu_custom_call.1} parent=27 // pred_check
          %p272 = pneg %p70
        $region34: #{tpu_custom_call.1} parent=27 // pred_check_branch
          %274 = sbr.rel (%p272) target = $region36
        $region35: #{tpu_custom_call.1} parent=27 // pred_region
          %s275 = sand.u32 %s60, 1
          %s276 = scalar_lea.sflag [#allocation3], %s275
          %s277 = sand.u32 %s60, 1
          %s278 = smul.addr %s277, 192
          %s279 = scalar_lea.vmem [#allocation2], %s278
          %s280 = smul.u32 16, %s24
          %s281 = ssub.s32 20, %s280
          %p282 = scmp.lt.s32.totalorder %s281, 16
          %s283 = scalar_select %p282, %s281, 16
          %s284 = smul.u32 64, %s283
          %s285 = smul.u32 %s284, 3
          %s287 = ssub.s32 3072, %s285
          %288 = vsyncadd %s276, %s287
          %p289 = scmp.ne.s32.totalorder 0, %s285
          %s290 = smul.addr %s280, 3
          %s291 = smul.addr %s290, 64
          %s292 = scalar_lea.hbm %s1, %s291
          %s293 = smul.u32 %s283, 3
          %s294 = smul.u32 4, %s293
          %s295 = sshll.u32 %s279, 4
          %s296 = int_to_ptr.vmem [resolvable:$true] %s295
          %s297 = sshll.u32 %s294, 4
          %301 = dma.hbm_to_vmem [thread:$0]  (%p289), %s292, %s297, %s296, %s276, 64, 64, 4
        $region36: #{tpu_custom_call.1} parent=27 // pred_fallthru
          _
        // Predicated region
        $region37: #{tpu_custom_call.1} parent=27 // pred_check
          %p302 = pneg %p96
        $region38: #{tpu_custom_call.1} parent=27 // pred_check_branch
          %304 = sbr.rel (%p302) target = $region40
        $region39: #{tpu_custom_call.1} parent=27 // pred_region
          %s305 = smul.u32 2, %s24
          %s306 = ssub.s32 3, %s305
          %p307 = scmp.lt.s32.totalorder %s306, 2
          %s308 = scalar_select %p307, %s306, 2
          %s309 = smul.u32 128, %s308
          %p310 = scmp.lt.s32.totalorder %s305, 2
          %s311 = scalar_select %p310, %s305, 2
          %s312 = smul.addr %s311, 8
          %s313 = scalar_lea.vmem %s2, %s312
          %s314 = smul.u32 2, %s24
          %s315 = ssub.s32 3, %s314
          %p316 = scmp.lt.s32.totalorder %s315, 2
          %s317 = scalar_select %p316, %s315, 2
          %s318 = smul.u32 128, %s317
        $region40: #{tpu_custom_call.1} parent=27 // pred_fallthru
          _
      $region28: #{tpu_custom_call.1} parent=5 // pred_fallthru
        _
      %p319 = scmp.le.s32.totalorder 1, %s24
      %p320 = scmp.lt.s32.totalorder %s24, 3
      %p321 = pnand %p319, %p320
      %p322 = pneg %p321
      // Predicated region
      $region41: #{tpu_custom_call.1} parent=5 // pred_check
        _
      $region42: #{tpu_custom_call.1} parent=5 // pred_check_branch
        %324 = sbr.rel (%p321) target = $region44
      $region43: #{tpu_custom_call.1} parent=5 // pred_region
        %s325 = ssub.s32 %s24, 1
        %s326 = sand.u32 %s63, 1
        %s327 = scalar_lea.sflag [#allocation3], %s326
        %s328 = sand.u32 %s63, 1
        %s329 = smul.addr %s328, 192
        %s330 = scalar_lea.vmem [#allocation2], %s329
        // Predicated region
        $region45: #{tpu_custom_call.1} parent=43 // pred_check
          %p331 = pneg %p76
        $region46: #{tpu_custom_call.1} parent=43 // pred_check_branch
          %333 = sbr.rel (%p331) target = $region48
        $region47: #{tpu_custom_call.1} parent=43 // pred_region
          %334 = dma.done %s327, 3072
        $region48: #{tpu_custom_call.1} parent=43 // pred_fallthru
          _
        // Predicated region
        $region49: #{tpu_custom_call.1} parent=43 // pred_check
          %p335 = pneg %p123
        $region50: #{tpu_custom_call.1} parent=43 // pred_check_branch
          %337 = sbr.rel (%p335) target = $region52
        $region51: #{tpu_custom_call.1} parent=43 // pred_region
          %338 = dma.done [#allocation6], 256
        $region52: #{tpu_custom_call.1} parent=43 // pred_fallthru
          _
        %s339 = smul.u32 2, %s29
        %s340 = ssub.s32 3, %s339
        %p341 = scmp.lt.s32.totalorder %s340, 2
        %s342 = scalar_select %p341, %s340, 2
        %s343 = smul.u32 128, %s342
        %p344 = scmp.lt.s32.totalorder %s339, 2
        %s345 = scalar_select %p344, %s339, 2
        %s346 = smul.addr %s345, 8
        %s347 = scalar_lea.vmem %s0, %s346
        %p348 = pneg %p50
        %p349 = pneg %p47
        %s350 = sand.u32 %s63, 1
        %s351 = scalar_lea.sflag [#allocation3], %s350
        %s352 = sand.u32 %s63, 1
        %s353 = smul.addr %s352, 192
        %s354 = scalar_lea.vmem [#allocation2], %s353
        %p355 = pneg %p76
        %p356 = pneg %p73
        %s357 = smul.u32 2, %s29
        %s358 = ssub.s32 3, %s357
        %p359 = scmp.lt.s32.totalorder %s358, 2
        %s360 = scalar_select %p359, %s358, 2
        %s361 = smul.u32 128, %s360
        %p362 = scmp.lt.s32.totalorder %s357, 2
        %s363 = scalar_select %p362, %s357, 2
        %s364 = smul.addr %s363, 8
        %s365 = scalar_lea.vmem %s2, %s364
        %p366 = pneg %p102
        %p367 = pneg %p99
        %p368 = pneg %p123
        %p369 = pneg %p120
        %p370 = pneg %p144
        %p371 = pneg %p141
        %p372 = pneg %p165
        %p373 = pneg %p162
        %p374 = pneg %p191
        %p375 = pneg %p188
        %s376 = sand.u32 %s178, 1
        %s377 = scalar_lea.sflag [#allocation4], %s376
        %s378 = sand.u32 %s178, 1
        %s379 = smul.addr %s378, 16
        %s380 = scalar_lea.vmem [#allocation7], %s379
        %p381 = pneg %p217
        %p382 = pneg %p214
        %s383 = sand.u32 %s204, 1
        %s384 = scalar_lea.sflag [#allocation9], %s383
        %s385 = sand.u32 %s204, 1
        %s386 = smul.addr %s385, 16
        %s387 = scalar_lea.vmem [#allocation8], %s386
        %s388 = smul.u32 2, %s29
        %s389 = ssub.s32 3, %s388
        %p390 = scmp.lt.s32.totalorder %s389, 2
        %s391 = scalar_select %p390, %s389, 2
        %s392 = smul.u32 128, %s391
        %p393 = scmp.lt.s32.totalorder %s388, 2
        %s394 = scalar_select %p393, %s388, 2
        %s395 = smul.addr %s394, 8
        %s396 = scalar_lea.vmem %s0, %s395
        %s397 = smul.u32 2, %s29
        %s398 = ssub.s32 3, %s397
        %p399 = scmp.lt.s32.totalorder %s398, 2
        %s400 = scalar_select %p399, %s398, 2
        %s401 = smul.u32 128, %s400
        %s402 = smul.u32 16, %s29
        %s403 = ssub.s32 20, %s402
        %p404 = scmp.lt.s32.totalorder %s403, 16
        %s405 = scalar_select %p404, %s403, 16
        %s406 = smul.u32 64, %s405
        %s407 = smul.u32 %s406, 3
        %s408 = smul.u32 2, %s29
        %s409 = ssub.s32 3, %s408
        %p410 = scmp.lt.s32.totalorder %s409, 2
        %s411 = scalar_select %p410, %s409, 2
        %s412 = smul.u32 128, %s411
        %p413 = scmp.lt.s32.totalorder %s408, 2
        %s414 = scalar_select %p413, %s408, 2
        %s415 = smul.addr %s414, 8
        %s416 = scalar_lea.vmem %s2, %s415
        %s417 = smul.u32 2, %s29
        %s418 = ssub.s32 3, %s417
        %p419 = scmp.lt.s32.totalorder %s418, 2
        %s420 = scalar_select %p419, %s418, 2
        %s421 = smul.u32 128, %s420
        %s422 = smul.u32 2, %s29
        %s423 = ssub.s32 3, %s422
        %p424 = scmp.lt.s32.totalorder %s423, 2
        %s425 = scalar_select %p424, %s423, 2
        %s426 = smul.u32 128, %s425
        %s427 = smul.u32 2, %s29
        %s428 = ssub.s32 3, %s427
        %p429 = scmp.lt.s32.totalorder %s428, 2
        %s430 = scalar_select %p429, %s428, 2
        %s431 = smul.u32 128, %s430
        %v433 = vld [vmem:[%s396] sm:$0xff]
        %v434 = vld [vmem:[%s396 + $0x8] sm:$0xff]
        %v435 = vld [vmem:[%s330] sm:$0xf]
        %v436 = vld [vmem:[%s330 + $0x4] sm:$0xf]
        %v437 = vld [vmem:[%s330 + $0x8] sm:$0xf]
        %v438 = vld [vmem:[%s330 + $0xc] sm:$0xf]
        %v439 = vld [vmem:[%s330 + $0x10] sm:$0xf]
        %v440 = vld [vmem:[%s330 + $0x14] sm:$0xf]
        %v441 = vld [vmem:[%s330 + $0x18] sm:$0xf]
        %v442 = vld [vmem:[%s330 + $0x1c] sm:$0xf]
        %v443 = vld [vmem:[%s330 + $0x20] sm:$0xf]
        %v444 = vld [vmem:[%s330 + $0x24] sm:$0xf]
        %v445 = vld [vmem:[%s330 + $0x28] sm:$0xf]
        %v446 = vld [vmem:[%s330 + $0x2c] sm:$0xf]
        %v447 = vld [vmem:[%s330 + $0x30] sm:$0xf]
        %v448 = vld [vmem:[%s330 + $0x34] sm:$0xf]
        %v449 = vld [vmem:[%s330 + $0x38] sm:$0xf]
        %v450 = vld [vmem:[%s330 + $0x3c] sm:$0xf]
        %v451 = vld [vmem:[%s330 + $0x40] sm:$0xf]
        %v452 = vld [vmem:[%s330 + $0x44] sm:$0xf]
        %v453 = vld [vmem:[%s330 + $0x48] sm:$0xf]
        %v454 = vld [vmem:[%s330 + $0x4c] sm:$0xf]
        %v455 = vld [vmem:[%s330 + $0x50] sm:$0xf]
        %v456 = vld [vmem:[%s330 + $0x54] sm:$0xf]
        %v457 = vld [vmem:[%s330 + $0x58] sm:$0xf]
        %v458 = vld [vmem:[%s330 + $0x5c] sm:$0xf]
        %v459 = vld [vmem:[%s330 + $0x60] sm:$0xf]
        %v460 = vld [vmem:[%s330 + $0x64] sm:$0xf]
        %v461 = vld [vmem:[%s330 + $0x68] sm:$0xf]
        %v462 = vld [vmem:[%s330 + $0x6c] sm:$0xf]
        %v463 = vld [vmem:[%s330 + $0x70] sm:$0xf]
        %v464 = vld [vmem:[%s330 + $0x74] sm:$0xf]
        %v465 = vld [vmem:[%s330 + $0x78] sm:$0xf]
        %v466 = vld [vmem:[%s330 + $0x7c] sm:$0xf]
        %v467 = vld [vmem:[%s330 + $0x80] sm:$0xf]
        %v468 = vld [vmem:[%s330 + $0x84] sm:$0xf]
        %v469 = vld [vmem:[%s330 + $0x88] sm:$0xf]
        %v470 = vld [vmem:[%s330 + $0x8c] sm:$0xf]
        %v471 = vld [vmem:[%s330 + $0x90] sm:$0xf]
        %v472 = vld [vmem:[%s330 + $0x94] sm:$0xf]
        %v473 = vld [vmem:[%s330 + $0x98] sm:$0xf]
        %v474 = vld [vmem:[%s330 + $0x9c] sm:$0xf]
        %v475 = vld [vmem:[%s330 + $0xa0] sm:$0xf]
        %v476 = vld [vmem:[%s330 + $0xa4] sm:$0xf]
        %v477 = vld [vmem:[%s330 + $0xa8] sm:$0xf]
        %v478 = vld [vmem:[%s330 + $0xac] sm:$0xf]
        %v479 = vld [vmem:[%s330 + $0xb0] sm:$0xf]
        %v480 = vld [vmem:[%s330 + $0xb4] sm:$0xf]
        %v481 = vld [vmem:[%s330 + $0xb8] sm:$0xf]
        %v482 = vld [vmem:[%s330 + $0xbc] sm:$0xf]
        %v483 = vld [vmem:[%s416] sm:$0xff]
        %v484 = vld [vmem:[%s416 + $0x8] sm:$0xff]
        %v485 = vpack.c.bf16 %v434, %v433
        %v486 = vld [vmem:[#allocation5] sm:$0xf]
        %v487 = vld [vmem:[#allocation5 + $0x4] sm:$0xf]
        %v488 = vld [vmem:[#allocation5 + $0x8] sm:$0xf]
        %v489 = vld [vmem:[#allocation5 + $0xc] sm:$0xf]
        %v494 = vunpack.c.l.b16 %v486
        %v495 = vunpack.c.l.b16 %v487
        %v496 = vunpack.c.l.b16 %v488
        %v497 = vunpack.c.l.b16 %v489
        %v498 = vpack.c.b16 %v495, %v494
        %v499 = vpack.c.b16 %v497, %v496
        %vm502 = vcmask 261120
        %v504 = vsel %vm502, %v485, 0
        %506 = vmatprep.subr.bf16.mxu0 0
        %507 = vmatpush1.bf16.msra.mxu0 %v498
        %508 = vmatprep.subr.bf16.mxu0 0
        %509 = vmatpush1.bf16.msra.mxu0 %v499
        %510 = vmatprep.subr.bf16.mxu0 0
        %511 = vmatpush1.bf16.msra.mxu0 0
        %512 = vmatprep.subr.bf16.mxu0 0
        %513 = vmatpush1.bf16.msra.mxu0 0
        %514 = vmatprep.subr.bf16.mxu0 0
        %515 = vmatpush1.bf16.msra.mxu0 0
        %516 = vmatprep.subr.bf16.mxu0 0
        %517 = vmatpush1.bf16.msra.mxu0 0
        %518 = vmatprep.subr.bf16.mxu0 0
        %519 = vmatpush1.bf16.msra.mxu0 0
        %520 = vmatprep.subr.bf16.mxu0 0
        %521 = vmatpush1.bf16.msra.mxu0 0
        %522 = vmatprep.subr.bf16.mxu0 0
        %523 = vmatpush1.bf16.msra.mxu0 0
        %524 = vmatprep.subr.bf16.mxu0 0
        %525 = vmatpush1.bf16.msra.mxu0 0
        %526 = vmatprep.subr.bf16.mxu0 0
        %527 = vmatpush1.bf16.msra.mxu0 0
        %528 = vmatprep.subr.bf16.mxu0 0
        %529 = vmatpush1.bf16.msra.mxu0 0
        %530 = vmatprep.subr.bf16.mxu0 0
        %531 = vmatpush1.bf16.msra.mxu0 0
        %532 = vmatprep.subr.bf16.mxu0 0
        %533 = vmatpush1.bf16.msra.mxu0 0
        %534 = vmatprep.subr.bf16.mxu0 0
        %535 = vmatpush1.bf16.msra.mxu0 0
        %536 = vmatprep.subr.bf16.mxu0 0
        %537 = vmatpush1.bf16.msra.mxu0 0
        %538 = vmatprep.mubr.bf16.mxu0 0
        %539 = vmatmul.mubr.bf16.gmra.mrb[0].mxu0 %v504
        %v540 = vpop.f32.mrb[0].mxu0
        %v541 = vadd.f32 0.0, %v540
        %v542 = vpop.f32.mrb[0].mxu0
        %v543 = vpop.f32.mrb[0].mxu0
        %v544 = vadd.f32 0.0, %v543
        %v545 = vpop.f32.mrb[0].mxu0
        %546 = vdwg.mxu0
        %v549 = vcombine.high %v541, %v541
        %v551 = vunpack.c.l.s4 1966171168
        %v552 = vunpack.c.0.s8 %v551
        %v553 = vlaneseq
        %v554 = vshrl.u32 %v553, 7
        %v555 = vsub.s32 %v552, %v554
        %v556 = vrot.slane %v541, %v555
        %v558 = vunpack.c.l.s4 1966171168
        %v559 = vunpack.c.0.s8 %v558
        %v560 = vlaneseq
        %v561 = vshrl.u32 %v560, 7
        %v562 = vsub.s32 %v559, %v561
        %v563 = vrot.slane %v549, %v562
        %v564 = vcombine.high %v556, %v556
        %v565 = vcombine.high %v563, %v563
        %v567 = vunpack.c.l.s4 1966171168
        %v568 = vunpack.c.0.s8 %v567
        %v569 = vlaneseq
        %v570 = vshrl.u32 %v569, 7
        %v571 = vsub.s32 %v568, %v570
        %v572 = vrot.slane %v556, %v571
        %v574 = vunpack.c.l.s4 1966171168
        %v575 = vunpack.c.0.s8 %v574
        %v576 = vlaneseq
        %v577 = vshrl.u32 %v576, 7
        %v578 = vsub.s32 %v575, %v577
        %v579 = vrot.slane %v563, %v578
        %v581 = vunpack.c.l.s4 1966171168
        %v582 = vunpack.c.0.s8 %v581
        %v583 = vlaneseq
        %v584 = vshrl.u32 %v583, 7
        %v585 = vsub.s32 %v582, %v584
        %v586 = vrot.slane %v564, %v585
        %v588 = vunpack.c.l.s4 1966171168
        %v589 = vunpack.c.0.s8 %v588
        %v590 = vlaneseq
        %v591 = vshrl.u32 %v590, 7
        %v592 = vsub.s32 %v589, %v591
        %v593 = vrot.slane %v565, %v592
        %v594 = vcombine.high %v572, %v572
        %v595 = vcombine.high %v579, %v579
        %v596 = vcombine.high %v586, %v586
        %v597 = vcombine.high %v593, %v593
        %v598 = vcombine.high %v544, %v544
        %v600 = vunpack.c.l.s4 1966171168
        %v601 = vunpack.c.0.s8 %v600
        %v602 = vlaneseq
        %v603 = vshrl.u32 %v602, 7
        %v604 = vsub.s32 %v601, %v603
        %v605 = vrot.slane %v544, %v604
        %v607 = vunpack.c.l.s4 1966171168
        %v608 = vunpack.c.0.s8 %v607
        %v609 = vlaneseq
        %v610 = vshrl.u32 %v609, 7
        %v611 = vsub.s32 %v608, %v610
        %v612 = vrot.slane %v598, %v611
        %v613 = vcombine.high %v605, %v605
        %v614 = vcombine.high %v612, %v612
        %v616 = vunpack.c.l.s4 1966171168
        %v617 = vunpack.c.0.s8 %v616
        %v618 = vlaneseq
        %v619 = vshrl.u32 %v618, 7
        %v620 = vsub.s32 %v617, %v619
        %v621 = vrot.slane %v605, %v620
        %v623 = vunpack.c.l.s4 1966171168
        %v624 = vunpack.c.0.s8 %v623
        %v625 = vlaneseq
        %v626 = vshrl.u32 %v625, 7
        %v627 = vsub.s32 %v624, %v626
        %v628 = vrot.slane %v612, %v627
        %v630 = vunpack.c.l.s4 1966171168
        %v631 = vunpack.c.0.s8 %v630
        %v632 = vlaneseq
        %v633 = vshrl.u32 %v632, 7
        %v634 = vsub.s32 %v631, %v633
        %v635 = vrot.slane %v613, %v634
        %v637 = vunpack.c.l.s4 1966171168
        %v638 = vunpack.c.0.s8 %v637
        %v639 = vlaneseq
        %v640 = vshrl.u32 %v639, 7
        %v641 = vsub.s32 %v638, %v640
        %v642 = vrot.slane %v614, %v641
        %v643 = vcombine.high %v621, %v621
        %v644 = vcombine.high %v628, %v628
        %v645 = vcombine.high %v635, %v635
        %v646 = vcombine.high %v642, %v642
        %v647 = vunpack.c.l.bf16 %v435
        %v648 = vunpack.c.l.bf16 %v436
        %v649 = vunpack.c.l.bf16 %v437
        %v650 = vunpack.c.l.bf16 %v438
        %v651 = vunpack.c.l.bf16 %v439
        %v652 = vunpack.c.l.bf16 %v440
        %v653 = vunpack.c.l.bf16 %v441
        %v654 = vunpack.c.l.bf16 %v442
        %v655 = vunpack.c.l.bf16 %v443
        %v656 = vunpack.c.l.bf16 %v444
        %v657 = vunpack.c.l.bf16 %v445
        %v658 = vunpack.c.l.bf16 %v446
        %v659 = vunpack.c.l.bf16 %v447
        %v660 = vunpack.c.l.bf16 %v448
        %v661 = vunpack.c.l.bf16 %v449
        %v662 = vunpack.c.l.bf16 %v450
        %v663 = vunpack.c.l.bf16 %v451
        %v664 = vunpack.c.l.bf16 %v452
        %v665 = vunpack.c.l.bf16 %v453
        %v666 = vunpack.c.l.bf16 %v454
        %v667 = vunpack.c.l.bf16 %v455
        %v668 = vunpack.c.l.bf16 %v456
        %v669 = vunpack.c.l.bf16 %v457
        %v670 = vunpack.c.l.bf16 %v458
        %v671 = vunpack.c.l.bf16 %v459
        %v672 = vunpack.c.l.bf16 %v460
        %v673 = vunpack.c.l.bf16 %v461
        %v674 = vunpack.c.l.bf16 %v462
        %v675 = vunpack.c.l.bf16 %v463
        %v676 = vunpack.c.l.bf16 %v464
        %v677 = vunpack.c.l.bf16 %v465
        %v678 = vunpack.c.l.bf16 %v466
        %v679 = vunpack.c.l.bf16 %v467
        %v680 = vunpack.c.l.bf16 %v468
        %v681 = vunpack.c.l.bf16 %v469
        %v682 = vunpack.c.l.bf16 %v470
        %v683 = vunpack.c.l.bf16 %v471
        %v684 = vunpack.c.l.bf16 %v472
        %v685 = vunpack.c.l.bf16 %v473
        %v686 = vunpack.c.l.bf16 %v474
        %v687 = vunpack.c.l.bf16 %v475
        %v688 = vunpack.c.l.bf16 %v476
        %v689 = vunpack.c.l.bf16 %v477
        %v690 = vunpack.c.l.bf16 %v478
        %v691 = vunpack.c.l.bf16 %v479
        %v692 = vunpack.c.l.bf16 %v480
        %v693 = vunpack.c.l.bf16 %v481
        %v694 = vunpack.c.l.bf16 %v482
        %v695 = vlaneseq
        %v696 = vshrl.u32 %v695, 7
        %v697 = vsub.s32 0, %v696
        %v698 = vrot.slane %v572, %v697
        %v699 = vlaneseq
        %v700 = vshrl.u32 %v699, 7
        %v701 = vsub.s32 0, %v700
        %v702 = vrot.slane %v586, %v701
        %v703 = vlaneseq
        %v704 = vshrl.u32 %v703, 7
        %v705 = vsub.s32 0, %v704
        %v706 = vrot.slane %v594, %v705
        %v707 = vlaneseq
        %v708 = vshrl.u32 %v707, 7
        %v709 = vsub.s32 0, %v708
        %v710 = vrot.slane %v596, %v709
        %v711 = vlaneseq
        %v712 = vshrl.u32 %v711, 7
        %v713 = vsub.s32 0, %v712
        %v714 = vrot.slane %v579, %v713
        %v715 = vlaneseq
        %v716 = vshrl.u32 %v715, 7
        %v717 = vsub.s32 0, %v716
        %v718 = vrot.slane %v593, %v717
        %v719 = vlaneseq
        %v720 = vshrl.u32 %v719, 7
        %v721 = vsub.s32 0, %v720
        %v722 = vrot.slane %v595, %v721
        %v723 = vlaneseq
        %v724 = vshrl.u32 %v723, 7
        %v725 = vsub.s32 0, %v724
        %v726 = vrot.slane %v597, %v725
        %v727 = vlaneseq
        %v728 = vshrl.u32 %v727, 7
        %v729 = vsub.s32 0, %v728
        %v730 = vrot.slane %v621, %v729
        %v731 = vlaneseq
        %v732 = vshrl.u32 %v731, 7
        %v733 = vsub.s32 0, %v732
        %v734 = vrot.slane %v635, %v733
        %v735 = vlaneseq
        %v736 = vshrl.u32 %v735, 7
        %v737 = vsub.s32 0, %v736
        %v738 = vrot.slane %v643, %v737
        %v739 = vlaneseq
        %v740 = vshrl.u32 %v739, 7
        %v741 = vsub.s32 0, %v740
        %v742 = vrot.slane %v645, %v741
        %v743 = vlaneseq
        %v744 = vshrl.u32 %v743, 7
        %v745 = vsub.s32 0, %v744
        %v746 = vrot.slane %v628, %v745
        %v747 = vlaneseq
        %v748 = vshrl.u32 %v747, 7
        %v749 = vsub.s32 0, %v748
        %v750 = vrot.slane %v642, %v749
        %v751 = vlaneseq
        %v752 = vshrl.u32 %v751, 7
        %v753 = vsub.s32 0, %v752
        %v754 = vrot.slane %v644, %v753
        %v755 = vlaneseq
        %v756 = vshrl.u32 %v755, 7
        %v757 = vsub.s32 0, %v756
        %v758 = vrot.slane %v646, %v757
        %v775 = vmul.f32 %v647, %v698
        %v776 = vmul.f32 %v648, %v698
        %v777 = vmul.f32 %v649, %v698
        %v778 = vmul.f32 %v650, %v702
        %v779 = vmul.f32 %v651, %v702
        %v780 = vmul.f32 %v652, %v702
        %v781 = vmul.f32 %v653, %v706
        %v782 = vmul.f32 %v654, %v706
        %v783 = vmul.f32 %v655, %v706
        %v784 = vmul.f32 %v656, %v710
        %v785 = vmul.f32 %v657, %v710
        %v786 = vmul.f32 %v658, %v710
        %v787 = vmul.f32 %v659, %v714
        %v788 = vmul.f32 %v660, %v714
        %v789 = vmul.f32 %v661, %v714
        %v790 = vmul.f32 %v662, %v718
        %v791 = vmul.f32 %v663, %v718
        %v792 = vmul.f32 %v664, %v718
        %v793 = vmul.f32 %v665, %v722
        %v794 = vmul.f32 %v666, %v722
        %v795 = vmul.f32 %v667, %v722
        %v796 = vmul.f32 %v668, %v726
        %v797 = vmul.f32 %v669, %v726
        %v798 = vmul.f32 %v670, %v726
        %v799 = vmul.f32 %v671, %v730
        %v800 = vmul.f32 %v672, %v730
        %v801 = vmul.f32 %v673, %v730
        %v802 = vmul.f32 %v674, %v734
        %v803 = vmul.f32 %v675, %v734
        %v804 = vmul.f32 %v676, %v734
        %v805 = vmul.f32 %v677, %v738
        %v806 = vmul.f32 %v678, %v738
        %v807 = vmul.f32 %v679, %v738
        %v808 = vmul.f32 %v680, %v742
        %v809 = vmul.f32 %v681, %v742
        %v810 = vmul.f32 %v682, %v742
        %v811 = vmul.f32 %v683, %v746
        %v812 = vmul.f32 %v684, %v746
        %v813 = vmul.f32 %v685, %v746
        %v814 = vmul.f32 %v686, %v750
        %v815 = vmul.f32 %v687, %v750
        %v816 = vmul.f32 %v688, %v750
        %v817 = vmul.f32 %v689, %v754
        %v818 = vmul.f32 %v690, %v754
        %v819 = vmul.f32 %v691, %v754
        %v820 = vmul.f32 %v692, %v758
        %v821 = vmul.f32 %v693, %v758
        %v822 = vmul.f32 %v694, %v758
        %vm823 = vcmask 523264
        %v824 = vsel %vm823, %v775, 0.0
        %825 = vadd.xlane.f32.xlu0 %v824
        %v826 = vpop.xlane.xlu0 %825
        %v827 = vsel %vm823, %v776, 0.0
        %828 = vadd.xlane.f32.xlu0 %v827
        %v829 = vpop.xlane.xlu0 %828
        %v830 = vsel %vm823, %v777, 0.0
        %831 = vadd.xlane.f32.xlu0 %v830
        %v832 = vpop.xlane.xlu0 %831
        %v833 = vsel %vm823, %v778, 0.0
        %834 = vadd.xlane.f32.xlu0 %v833
        %v835 = vpop.xlane.xlu0 %834
        %v836 = vsel %vm823, %v779, 0.0
        %837 = vadd.xlane.f32.xlu0 %v836
        %v838 = vpop.xlane.xlu0 %837
        %v839 = vsel %vm823, %v780, 0.0
        %840 = vadd.xlane.f32.xlu0 %v839
        %v841 = vpop.xlane.xlu0 %840
        %v842 = vsel %vm823, %v781, 0.0
        %843 = vadd.xlane.f32.xlu0 %v842
        %v844 = vpop.xlane.xlu0 %843
        %v845 = vsel %vm823, %v782, 0.0
        %846 = vadd.xlane.f32.xlu0 %v845
        %v847 = vpop.xlane.xlu0 %846
        %v848 = vsel %vm823, %v783, 0.0
        %849 = vadd.xlane.f32.xlu0 %v848
        %v850 = vpop.xlane.xlu0 %849
        %v851 = vsel %vm823, %v784, 0.0
        %852 = vadd.xlane.f32.xlu0 %v851
        %v853 = vpop.xlane.xlu0 %852
        %v854 = vsel %vm823, %v785, 0.0
        %855 = vadd.xlane.f32.xlu0 %v854
        %v856 = vpop.xlane.xlu0 %855
        %v857 = vsel %vm823, %v786, 0.0
        %858 = vadd.xlane.f32.xlu0 %v857
        %v859 = vpop.xlane.xlu0 %858
        %v860 = vsel %vm823, %v787, 0.0
        %861 = vadd.xlane.f32.xlu0 %v860
        %v862 = vpop.xlane.xlu0 %861
        %v863 = vsel %vm823, %v788, 0.0
        %864 = vadd.xlane.f32.xlu0 %v863
        %v865 = vpop.xlane.xlu0 %864
        %v866 = vsel %vm823, %v789, 0.0
        %867 = vadd.xlane.f32.xlu0 %v866
        %v868 = vpop.xlane.xlu0 %867
        %v869 = vsel %vm823, %v790, 0.0
        %870 = vadd.xlane.f32.xlu0 %v869
        %v871 = vpop.xlane.xlu0 %870
        %v872 = vsel %vm823, %v791, 0.0
        %873 = vadd.xlane.f32.xlu0 %v872
        %v874 = vpop.xlane.xlu0 %873
        %v875 = vsel %vm823, %v792, 0.0
        %876 = vadd.xlane.f32.xlu0 %v875
        %v877 = vpop.xlane.xlu0 %876
        %v878 = vsel %vm823, %v793, 0.0
        %879 = vadd.xlane.f32.xlu0 %v878
        %v880 = vpop.xlane.xlu0 %879
        %v881 = vsel %vm823, %v794, 0.0
        %882 = vadd.xlane.f32.xlu0 %v881
        %v883 = vpop.xlane.xlu0 %882
        %v884 = vsel %vm823, %v795, 0.0
        %885 = vadd.xlane.f32.xlu0 %v884
        %v886 = vpop.xlane.xlu0 %885
        %v887 = vsel %vm823, %v796, 0.0
        %888 = vadd.xlane.f32.xlu0 %v887
        %v889 = vpop.xlane.xlu0 %888
        %v890 = vsel %vm823, %v797, 0.0
        %891 = vadd.xlane.f32.xlu0 %v890
        %v892 = vpop.xlane.xlu0 %891
        %v893 = vsel %vm823, %v798, 0.0
        %894 = vadd.xlane.f32.xlu0 %v893
        %v895 = vpop.xlane.xlu0 %894
        %v896 = vsel %vm823, %v799, 0.0
        %897 = vadd.xlane.f32.xlu0 %v896
        %v898 = vpop.xlane.xlu0 %897
        %v899 = vsel %vm823, %v800, 0.0
        %900 = vadd.xlane.f32.xlu0 %v899
        %v901 = vpop.xlane.xlu0 %900
        %v902 = vsel %vm823, %v801, 0.0
        %903 = vadd.xlane.f32.xlu0 %v902
        %v904 = vpop.xlane.xlu0 %903
        %v905 = vsel %vm823, %v802, 0.0
        %906 = vadd.xlane.f32.xlu0 %v905
        %v907 = vpop.xlane.xlu0 %906
        %v908 = vsel %vm823, %v803, 0.0
        %909 = vadd.xlane.f32.xlu0 %v908
        %v910 = vpop.xlane.xlu0 %909
        %v911 = vsel %vm823, %v804, 0.0
        %912 = vadd.xlane.f32.xlu0 %v911
        %v913 = vpop.xlane.xlu0 %912
        %v914 = vsel %vm823, %v805, 0.0
        %915 = vadd.xlane.f32.xlu0 %v914
        %v916 = vpop.xlane.xlu0 %915
        %v917 = vsel %vm823, %v806, 0.0
        %918 = vadd.xlane.f32.xlu0 %v917
        %v919 = vpop.xlane.xlu0 %918
        %v920 = vsel %vm823, %v807, 0.0
        %921 = vadd.xlane.f32.xlu0 %v920
        %v922 = vpop.xlane.xlu0 %921
        %v923 = vsel %vm823, %v808, 0.0
        %924 = vadd.xlane.f32.xlu0 %v923
        %v925 = vpop.xlane.xlu0 %924
        %v926 = vsel %vm823, %v809, 0.0
        %927 = vadd.xlane.f32.xlu0 %v926
        %v928 = vpop.xlane.xlu0 %927
        %v929 = vsel %vm823, %v810, 0.0
        %930 = vadd.xlane.f32.xlu0 %v929
        %v931 = vpop.xlane.xlu0 %930
        %v932 = vsel %vm823, %v811, 0.0
        %933 = vadd.xlane.f32.xlu0 %v932
        %v934 = vpop.xlane.xlu0 %933
        %v935 = vsel %vm823, %v812, 0.0
        %936 = vadd.xlane.f32.xlu0 %v935
        %v937 = vpop.xlane.xlu0 %936
        %v938 = vsel %vm823, %v813, 0.0
        %939 = vadd.xlane.f32.xlu0 %v938
        %v940 = vpop.xlane.xlu0 %939
        %v941 = vsel %vm823, %v814, 0.0
        %942 = vadd.xlane.f32.xlu0 %v941
        %v943 = vpop.xlane.xlu0 %942
        %v944 = vsel %vm823, %v815, 0.0
        %945 = vadd.xlane.f32.xlu0 %v944
        %v946 = vpop.xlane.xlu0 %945
        %v947 = vsel %vm823, %v816, 0.0
        %948 = vadd.xlane.f32.xlu0 %v947
        %v949 = vpop.xlane.xlu0 %948
        %v950 = vsel %vm823, %v817, 0.0
        %951 = vadd.xlane.f32.xlu0 %v950
        %v952 = vpop.xlane.xlu0 %951
        %v953 = vsel %vm823, %v818, 0.0
        %954 = vadd.xlane.f32.xlu0 %v953
        %v955 = vpop.xlane.xlu0 %954
        %v956 = vsel %vm823, %v819, 0.0
        %957 = vadd.xlane.f32.xlu0 %v956
        %v958 = vpop.xlane.xlu0 %957
        %v959 = vsel %vm823, %v820, 0.0
        %960 = vadd.xlane.f32.xlu0 %v959
        %v961 = vpop.xlane.xlu0 %960
        %v962 = vsel %vm823, %v821, 0.0
        %963 = vadd.xlane.f32.xlu0 %v962
        %v964 = vpop.xlane.xlu0 %963
        %v965 = vsel %vm823, %v822, 0.0
        %966 = vadd.xlane.f32.xlu0 %v965
        %v967 = vpop.xlane.xlu0 %966
        %vm968 = vcmp.gt.f32.partialorder %v483, 0.0
        %vm969 = vcmp.gt.f32.partialorder %v484, 0.0
        %v1018 = vlaneseq
        %v1019 = vand.u32 %v1018, 127
        %v1020 = vlaneseq
        %v1021 = vshrl.u32 %v1020, 7
        %v1022 = vsub.s32 %v1019, %v1021
        %v1023 = vrot.slane %v826, %v1022
        %v1024 = vadd.s32 %v1019, 4294967288
        %v1025 = vlaneseq
        %v1026 = vshrl.u32 %v1025, 7
        %v1027 = vsub.s32 %v1024, %v1026
        %v1028 = vrot.slane %v829, %v1027
        %vm1029 = vcmask 130112
        %v1030 = vsel %vm1029, %v1028, %v1023
        %v1031 = vadd.s32 %v1019, 4294967280
        %v1032 = vlaneseq
        %v1033 = vshrl.u32 %v1032, 7
        %v1034 = vsub.s32 %v1031, %v1033
        %v1035 = vrot.slane %v832, %v1034
        %vm1036 = vcmask 195712
        %v1037 = vsel %vm1036, %v1035, %v1030
        %v1038 = vlaneseq
        %v1039 = vshrl.u32 %v1038, 7
        %v1040 = vsub.s32 %v1019, %v1039
        %v1041 = vrot.slane %v835, %v1040
        %v1042 = vlaneseq
        %v1043 = vshrl.u32 %v1042, 7
        %v1044 = vsub.s32 %v1024, %v1043
        %v1045 = vrot.slane %v838, %v1044
        %v1046 = vsel %vm1029, %v1045, %v1041
        %v1047 = vlaneseq
        %v1048 = vshrl.u32 %v1047, 7
        %v1049 = vsub.s32 %v1031, %v1048
        %v1050 = vrot.slane %v841, %v1049
        %v1051 = vsel %vm1036, %v1050, %v1046
        %v1052 = vlaneseq
        %v1053 = vshrl.u32 %v1052, 7
        %v1054 = vsub.s32 %v1019, %v1053
        %v1055 = vrot.slane %v844, %v1054
        %v1056 = vlaneseq
        %v1057 = vshrl.u32 %v1056, 7
        %v1058 = vsub.s32 %v1024, %v1057
        %v1059 = vrot.slane %v847, %v1058
        %v1060 = vsel %vm1029, %v1059, %v1055
        %v1061 = vlaneseq
        %v1062 = vshrl.u32 %v1061, 7
        %v1063 = vsub.s32 %v1031, %v1062
        %v1064 = vrot.slane %v850, %v1063
        %v1065 = vsel %vm1036, %v1064, %v1060
        %v1066 = vlaneseq
        %v1067 = vshrl.u32 %v1066, 7
        %v1068 = vsub.s32 %v1019, %v1067
        %v1069 = vrot.slane %v853, %v1068
        %v1070 = vlaneseq
        %v1071 = vshrl.u32 %v1070, 7
        %v1072 = vsub.s32 %v1024, %v1071
        %v1073 = vrot.slane %v856, %v1072
        %v1074 = vsel %vm1029, %v1073, %v1069
        %v1075 = vlaneseq
        %v1076 = vshrl.u32 %v1075, 7
        %v1077 = vsub.s32 %v1031, %v1076
        %v1078 = vrot.slane %v859, %v1077
        %v1079 = vsel %vm1036, %v1078, %v1074
        %v1080 = vlaneseq
        %v1081 = vshrl.u32 %v1080, 7
        %v1082 = vsub.s32 %v1019, %v1081
        %v1083 = vrot.slane %v862, %v1082
        %v1084 = vlaneseq
        %v1085 = vshrl.u32 %v1084, 7
        %v1086 = vsub.s32 %v1024, %v1085
        %v1087 = vrot.slane %v865, %v1086
        %v1088 = vsel %vm1029, %v1087, %v1083
        %v1089 = vlaneseq
        %v1090 = vshrl.u32 %v1089, 7
        %v1091 = vsub.s32 %v1031, %v1090
        %v1092 = vrot.slane %v868, %v1091
        %v1093 = vsel %vm1036, %v1092, %v1088
        %v1094 = vlaneseq
        %v1095 = vshrl.u32 %v1094, 7
        %v1096 = vsub.s32 %v1019, %v1095
        %v1097 = vrot.slane %v871, %v1096
        %v1098 = vlaneseq
        %v1099 = vshrl.u32 %v1098, 7
        %v1100 = vsub.s32 %v1024, %v1099
        %v1101 = vrot.slane %v874, %v1100
        %v1102 = vsel %vm1029, %v1101, %v1097
        %v1103 = vlaneseq
        %v1104 = vshrl.u32 %v1103, 7
        %v1105 = vsub.s32 %v1031, %v1104
        %v1106 = vrot.slane %v877, %v1105
        %v1107 = vsel %vm1036, %v1106, %v1102
        %v1108 = vlaneseq
        %v1109 = vshrl.u32 %v1108, 7
        %v1110 = vsub.s32 %v1019, %v1109
        %v1111 = vrot.slane %v880, %v1110
        %v1112 = vlaneseq
        %v1113 = vshrl.u32 %v1112, 7
        %v1114 = vsub.s32 %v1024, %v1113
        %v1115 = vrot.slane %v883, %v1114
        %v1116 = vsel %vm1029, %v1115, %v1111
        %v1117 = vlaneseq
        %v1118 = vshrl.u32 %v1117, 7
        %v1119 = vsub.s32 %v1031, %v1118
        %v1120 = vrot.slane %v886, %v1119
        %v1121 = vsel %vm1036, %v1120, %v1116
        %v1122 = vlaneseq
        %v1123 = vshrl.u32 %v1122, 7
        %v1124 = vsub.s32 %v1019, %v1123
        %v1125 = vrot.slane %v889, %v1124
        %v1126 = vlaneseq
        %v1127 = vshrl.u32 %v1126, 7
        %v1128 = vsub.s32 %v1024, %v1127
        %v1129 = vrot.slane %v892, %v1128
        %v1130 = vsel %vm1029, %v1129, %v1125
        %v1131 = vlaneseq
        %v1132 = vshrl.u32 %v1131, 7
        %v1133 = vsub.s32 %v1031, %v1132
        %v1134 = vrot.slane %v895, %v1133
        %v1135 = vsel %vm1036, %v1134, %v1130
        %v1136 = vlaneseq
        %v1137 = vshrl.u32 %v1136, 7
        %v1138 = vsub.s32 %v1019, %v1137
        %v1139 = vrot.slane %v898, %v1138
        %v1140 = vlaneseq
        %v1141 = vshrl.u32 %v1140, 7
        %v1142 = vsub.s32 %v1024, %v1141
        %v1143 = vrot.slane %v901, %v1142
        %v1144 = vsel %vm1029, %v1143, %v1139
        %v1145 = vlaneseq
        %v1146 = vshrl.u32 %v1145, 7
        %v1147 = vsub.s32 %v1031, %v1146
        %v1148 = vrot.slane %v904, %v1147
        %v1149 = vsel %vm1036, %v1148, %v1144
        %v1150 = vlaneseq
        %v1151 = vshrl.u32 %v1150, 7
        %v1152 = vsub.s32 %v1019, %v1151
        %v1153 = vrot.slane %v907, %v1152
        %v1154 = vlaneseq
        %v1155 = vshrl.u32 %v1154, 7
        %v1156 = vsub.s32 %v1024, %v1155
        %v1157 = vrot.slane %v910, %v1156
        %v1158 = vsel %vm1029, %v1157, %v1153
        %v1159 = vlaneseq
        %v1160 = vshrl.u32 %v1159, 7
        %v1161 = vsub.s32 %v1031, %v1160
        %v1162 = vrot.slane %v913, %v1161
        %v1163 = vsel %vm1036, %v1162, %v1158
        %v1164 = vlaneseq
        %v1165 = vshrl.u32 %v1164, 7
        %v1166 = vsub.s32 %v1019, %v1165
        %v1167 = vrot.slane %v916, %v1166
        %v1168 = vlaneseq
        %v1169 = vshrl.u32 %v1168, 7
        %v1170 = vsub.s32 %v1024, %v1169
        %v1171 = vrot.slane %v919, %v1170
        %v1172 = vsel %vm1029, %v1171, %v1167
        %v1173 = vlaneseq
        %v1174 = vshrl.u32 %v1173, 7
        %v1175 = vsub.s32 %v1031, %v1174
        %v1176 = vrot.slane %v922, %v1175
        %v1177 = vsel %vm1036, %v1176, %v1172
        %v1178 = vlaneseq
        %v1179 = vshrl.u32 %v1178, 7
        %v1180 = vsub.s32 %v1019, %v1179
        %v1181 = vrot.slane %v925, %v1180
        %v1182 = vlaneseq
        %v1183 = vshrl.u32 %v1182, 7
        %v1184 = vsub.s32 %v1024, %v1183
        %v1185 = vrot.slane %v928, %v1184
        %v1186 = vsel %vm1029, %v1185, %v1181
        %v1187 = vlaneseq
        %v1188 = vshrl.u32 %v1187, 7
        %v1189 = vsub.s32 %v1031, %v1188
        %v1190 = vrot.slane %v931, %v1189
        %v1191 = vsel %vm1036, %v1190, %v1186
        %v1192 = vlaneseq
        %v1193 = vshrl.u32 %v1192, 7
        %v1194 = vsub.s32 %v1019, %v1193
        %v1195 = vrot.slane %v934, %v1194
        %v1196 = vlaneseq
        %v1197 = vshrl.u32 %v1196, 7
        %v1198 = vsub.s32 %v1024, %v1197
        %v1199 = vrot.slane %v937, %v1198
        %v1200 = vsel %vm1029, %v1199, %v1195
        %v1201 = vlaneseq
        %v1202 = vshrl.u32 %v1201, 7
        %v1203 = vsub.s32 %v1031, %v1202
        %v1204 = vrot.slane %v940, %v1203
        %v1205 = vsel %vm1036, %v1204, %v1200
        %v1206 = vlaneseq
        %v1207 = vshrl.u32 %v1206, 7
        %v1208 = vsub.s32 %v1019, %v1207
        %v1209 = vrot.slane %v943, %v1208
        %v1210 = vlaneseq
        %v1211 = vshrl.u32 %v1210, 7
        %v1212 = vsub.s32 %v1024, %v1211
        %v1213 = vrot.slane %v946, %v1212
        %v1214 = vsel %vm1029, %v1213, %v1209
        %v1215 = vlaneseq
        %v1216 = vshrl.u32 %v1215, 7
        %v1217 = vsub.s32 %v1031, %v1216
        %v1218 = vrot.slane %v949, %v1217
        %v1219 = vsel %vm1036, %v1218, %v1214
        %v1220 = vlaneseq
        %v1221 = vshrl.u32 %v1220, 7
        %v1222 = vsub.s32 %v1019, %v1221
        %v1223 = vrot.slane %v952, %v1222
        %v1224 = vlaneseq
        %v1225 = vshrl.u32 %v1224, 7
        %v1226 = vsub.s32 %v1024, %v1225
        %v1227 = vrot.slane %v955, %v1226
        %v1228 = vsel %vm1029, %v1227, %v1223
        %v1229 = vlaneseq
        %v1230 = vshrl.u32 %v1229, 7
        %v1231 = vsub.s32 %v1031, %v1230
        %v1232 = vrot.slane %v958, %v1231
        %v1233 = vsel %vm1036, %v1232, %v1228
        %v1234 = vlaneseq
        %v1235 = vshrl.u32 %v1234, 7
        %v1236 = vsub.s32 %v1019, %v1235
        %v1237 = vrot.slane %v961, %v1236
        %v1238 = vlaneseq
        %v1239 = vshrl.u32 %v1238, 7
        %v1240 = vsub.s32 %v1024, %v1239
        %v1241 = vrot.slane %v964, %v1240
        %v1242 = vsel %vm1029, %v1241, %v1237
        %v1243 = vlaneseq
        %v1244 = vshrl.u32 %v1243, 7
        %v1245 = vsub.s32 %v1031, %v1244
        %v1246 = vrot.slane %v967, %v1245
        %v1247 = vsel %vm1036, %v1246, %v1242
        %vm1248 = vcmask 1041409
        %v1249 = vsel %vm1248, %v1051, %v1037
        %vm1250 = vcmask 1042434
        %v1251 = vsel %vm1250, %v1065, %v1249
        %vm1252 = vcmask 1043459
        %v1253 = vsel %vm1252, %v1079, %v1251
        %vm1254 = vcmask 1044484
        %v1255 = vsel %vm1254, %v1093, %v1253
        %vm1256 = vcmask 1045509
        %v1257 = vsel %vm1256, %v1107, %v1255
        %vm1258 = vcmask 1046534
        %v1259 = vsel %vm1258, %v1121, %v1257
        %vm1260 = vcmask 1047559
        %v1261 = vsel %vm1260, %v1135, %v1259
        %v1262 = vsel %vm1248, %v1163, %v1149
        %v1263 = vsel %vm1250, %v1177, %v1262
        %v1264 = vsel %vm1252, %v1191, %v1263
        %v1265 = vsel %vm1254, %v1205, %v1264
        %v1266 = vsel %vm1256, %v1219, %v1265
        %v1267 = vsel %vm1258, %v1233, %v1266
        %v1268 = vsel %vm1260, %v1247, %v1267
        %v1271 = vsel %vm968, -inf, %v1261
        %v1272 = vsel %vm969, -inf, %v1268
        %vm1273 = vcmask 195584
        %v1274 = vsel %vm1273, %v1271, -inf
        %1275 = vmax.xlane.f32.xlu0 %v1274
        %v1276 = vpop.xlane.xlu0 %1275
        %v1277 = vsel %vm1273, %v1272, -inf
        %1278 = vmax.xlane.f32.xlu0 %v1277
        %v1279 = vpop.xlane.xlu0 %1278
        %v1280 = vsub.f32 %v1271, %v1276
        %v1281 = vsub.f32 %v1272, %v1279
        %v1282 = vmul.f32 %v1280, 1.442695
        %v1283 = vpow.pop %v1282
        %v1284 = vmul.f32 %v1281, 1.442695
        %v1285 = vpow.pop %v1284
        %v1286 = vsel %vm1273, %v1283, 0.0
        %1287 = vadd.xlane.f32.xlu0 %v1286
        %v1288 = vpop.xlane.xlu0 %1287
        %v1289 = vsel %vm1273, %v1285, 0.0
        %1290 = vadd.xlane.f32.xlu0 %v1289
        %v1291 = vpop.xlane.xlu0 %1290
        %v1292 = vrcp.pop %v1288
        %v1293 = vmul.f32 %v1283, %v1292
        %v1294 = vrcp.pop %v1291
        %v1295 = vmul.f32 %v1285, %v1294
        %1296 = vst.msk [vmem:[%s387] sm:$0xff] %vm1273, %v1293
        %1297 = vst.msk [vmem:[%s387 + $0x8] sm:$0xff] %vm1273, %v1295
        %v1298 = vlaneseq
        %v1299 = vshrl.u32 %v1298, 7
        %v1300 = vsub.s32 0, %v1299
        %v1301 = vrot.slane %v1293, %v1300
        %1303 = vbcast.lane.b32.xlu0 %v1301, 256
        %v1304 = vpop.permute.xlu0 %1303
        %s1306 = sor.u32 256, 8
        %1307 = vbcast.lane.b32.xlu0 %v1301, %s1306
        %v1308 = vpop.permute.xlu0 %1307
        %s1310 = sor.u32 256, 16
        %1311 = vbcast.lane.b32.xlu0 %v1301, %s1310
        %v1312 = vpop.permute.xlu0 %1311
        %v1313 = vlaneseq
        %v1314 = vshrl.u32 %v1313, 7
        %v1315 = vsub.s32 1, %v1314
        %v1316 = vrot.slane %v1293, %v1315
        %1318 = vbcast.lane.b32.xlu0 %v1316, 256
        %v1319 = vpop.permute.xlu0 %1318
        %s1321 = sor.u32 256, 8
        %1322 = vbcast.lane.b32.xlu0 %v1316, %s1321
        %v1323 = vpop.permute.xlu0 %1322
        %s1325 = sor.u32 256, 16
        %1326 = vbcast.lane.b32.xlu0 %v1316, %s1325
        %v1327 = vpop.permute.xlu0 %1326
        %v1328 = vlaneseq
        %v1329 = vshrl.u32 %v1328, 7
        %v1330 = vsub.s32 2, %v1329
        %v1331 = vrot.slane %v1293, %v1330
        %1333 = vbcast.lane.b32.xlu0 %v1331, 256
        %v1334 = vpop.permute.xlu0 %1333
        %s1336 = sor.u32 256, 8
        %1337 = vbcast.lane.b32.xlu0 %v1331, %s1336
        %v1338 = vpop.permute.xlu0 %1337
        %s1340 = sor.u32 256, 16
        %1341 = vbcast.lane.b32.xlu0 %v1331, %s1340
        %v1342 = vpop.permute.xlu0 %1341
        %v1343 = vlaneseq
        %v1344 = vshrl.u32 %v1343, 7
        %v1345 = vsub.s32 3, %v1344
        %v1346 = vrot.slane %v1293, %v1345
        %1348 = vbcast.lane.b32.xlu0 %v1346, 256
        %v1349 = vpop.permute.xlu0 %1348
        %s1351 = sor.u32 256, 8
        %1352 = vbcast.lane.b32.xlu0 %v1346, %s1351
        %v1353 = vpop.permute.xlu0 %1352
        %s1355 = sor.u32 256, 16
        %1356 = vbcast.lane.b32.xlu0 %v1346, %s1355
        %v1357 = vpop.permute.xlu0 %1356
        %v1358 = vlaneseq
        %v1359 = vshrl.u32 %v1358, 7
        %v1360 = vsub.s32 4, %v1359
        %v1361 = vrot.slane %v1293, %v1360
        %1363 = vbcast.lane.b32.xlu0 %v1361, 256
        %v1364 = vpop.permute.xlu0 %1363
        %s1366 = sor.u32 256, 8
        %1367 = vbcast.lane.b32.xlu0 %v1361, %s1366
        %v1368 = vpop.permute.xlu0 %1367
        %s1370 = sor.u32 256, 16
        %1371 = vbcast.lane.b32.xlu0 %v1361, %s1370
        %v1372 = vpop.permute.xlu0 %1371
        %v1373 = vlaneseq
        %v1374 = vshrl.u32 %v1373, 7
        %v1375 = vsub.s32 5, %v1374
        %v1376 = vrot.slane %v1293, %v1375
        %1378 = vbcast.lane.b32.xlu0 %v1376, 256
        %v1379 = vpop.permute.xlu0 %1378
        %s1381 = sor.u32 256, 8
        %1382 = vbcast.lane.b32.xlu0 %v1376, %s1381
        %v1383 = vpop.permute.xlu0 %1382
        %s1385 = sor.u32 256, 16
        %1386 = vbcast.lane.b32.xlu0 %v1376, %s1385
        %v1387 = vpop.permute.xlu0 %1386
        %v1388 = vlaneseq
        %v1389 = vshrl.u32 %v1388, 7
        %v1390 = vsub.s32 6, %v1389
        %v1391 = vrot.slane %v1293, %v1390
        %1393 = vbcast.lane.b32.xlu0 %v1391, 256
        %v1394 = vpop.permute.xlu0 %1393
        %s1396 = sor.u32 256, 8
        %1397 = vbcast.lane.b32.xlu0 %v1391, %s1396
        %v1398 = vpop.permute.xlu0 %1397
        %s1400 = sor.u32 256, 16
        %1401 = vbcast.lane.b32.xlu0 %v1391, %s1400
        %v1402 = vpop.permute.xlu0 %1401
        %v1403 = vlaneseq
        %v1404 = vshrl.u32 %v1403, 7
        %v1405 = vsub.s32 7, %v1404
        %v1406 = vrot.slane %v1293, %v1405
        %1408 = vbcast.lane.b32.xlu0 %v1406, 256
        %v1409 = vpop.permute.xlu0 %1408
        %s1411 = sor.u32 256, 8
        %1412 = vbcast.lane.b32.xlu0 %v1406, %s1411
        %v1413 = vpop.permute.xlu0 %1412
        %s1415 = sor.u32 256, 16
        %1416 = vbcast.lane.b32.xlu0 %v1406, %s1415
        %v1417 = vpop.permute.xlu0 %1416
        %v1418 = vlaneseq
        %v1419 = vshrl.u32 %v1418, 7
        %v1420 = vsub.s32 0, %v1419
        %v1421 = vrot.slane %v1295, %v1420
        %1423 = vbcast.lane.b32.xlu0 %v1421, 256
        %v1424 = vpop.permute.xlu0 %1423
        %s1426 = sor.u32 256, 8
        %1427 = vbcast.lane.b32.xlu0 %v1421, %s1426
        %v1428 = vpop.permute.xlu0 %1427
        %s1430 = sor.u32 256, 16
        %1431 = vbcast.lane.b32.xlu0 %v1421, %s1430
        %v1432 = vpop.permute.xlu0 %1431
        %v1433 = vlaneseq
        %v1434 = vshrl.u32 %v1433, 7
        %v1435 = vsub.s32 1, %v1434
        %v1436 = vrot.slane %v1295, %v1435
        %1438 = vbcast.lane.b32.xlu0 %v1436, 256
        %v1439 = vpop.permute.xlu0 %1438
        %s1441 = sor.u32 256, 8
        %1442 = vbcast.lane.b32.xlu0 %v1436, %s1441
        %v1443 = vpop.permute.xlu0 %1442
        %s1445 = sor.u32 256, 16
        %1446 = vbcast.lane.b32.xlu0 %v1436, %s1445
        %v1447 = vpop.permute.xlu0 %1446
        %v1448 = vlaneseq
        %v1449 = vshrl.u32 %v1448, 7
        %v1450 = vsub.s32 2, %v1449
        %v1451 = vrot.slane %v1295, %v1450
        %1453 = vbcast.lane.b32.xlu0 %v1451, 256
        %v1454 = vpop.permute.xlu0 %1453
        %s1456 = sor.u32 256, 8
        %1457 = vbcast.lane.b32.xlu0 %v1451, %s1456
        %v1458 = vpop.permute.xlu0 %1457
        %s1460 = sor.u32 256, 16
        %1461 = vbcast.lane.b32.xlu0 %v1451, %s1460
        %v1462 = vpop.permute.xlu0 %1461
        %v1463 = vlaneseq
        %v1464 = vshrl.u32 %v1463, 7
        %v1465 = vsub.s32 3, %v1464
        %v1466 = vrot.slane %v1295, %v1465
        %1468 = vbcast.lane.b32.xlu0 %v1466, 256
        %v1469 = vpop.permute.xlu0 %1468
        %s1471 = sor.u32 256, 8
        %1472 = vbcast.lane.b32.xlu0 %v1466, %s1471
        %v1473 = vpop.permute.xlu0 %1472
        %s1475 = sor.u32 256, 16
        %1476 = vbcast.lane.b32.xlu0 %v1466, %s1475
        %v1477 = vpop.permute.xlu0 %1476
        %v1478 = vlaneseq
        %v1479 = vshrl.u32 %v1478, 7
        %v1480 = vsub.s32 4, %v1479
        %v1481 = vrot.slane %v1295, %v1480
        %1483 = vbcast.lane.b32.xlu0 %v1481, 256
        %v1484 = vpop.permute.xlu0 %1483
        %s1486 = sor.u32 256, 8
        %1487 = vbcast.lane.b32.xlu0 %v1481, %s1486
        %v1488 = vpop.permute.xlu0 %1487
        %s1490 = sor.u32 256, 16
        %1491 = vbcast.lane.b32.xlu0 %v1481, %s1490
        %v1492 = vpop.permute.xlu0 %1491
        %v1493 = vlaneseq
        %v1494 = vshrl.u32 %v1493, 7
        %v1495 = vsub.s32 5, %v1494
        %v1496 = vrot.slane %v1295, %v1495
        %1498 = vbcast.lane.b32.xlu0 %v1496, 256
        %v1499 = vpop.permute.xlu0 %1498
        %s1501 = sor.u32 256, 8
        %1502 = vbcast.lane.b32.xlu0 %v1496, %s1501
        %v1503 = vpop.permute.xlu0 %1502
        %s1505 = sor.u32 256, 16
        %1506 = vbcast.lane.b32.xlu0 %v1496, %s1505
        %v1507 = vpop.permute.xlu0 %1506
        %v1508 = vlaneseq
        %v1509 = vshrl.u32 %v1508, 7
        %v1510 = vsub.s32 6, %v1509
        %v1511 = vrot.slane %v1295, %v1510
        %1513 = vbcast.lane.b32.xlu0 %v1511, 256
        %v1514 = vpop.permute.xlu0 %1513
        %s1516 = sor.u32 256, 8
        %1517 = vbcast.lane.b32.xlu0 %v1511, %s1516
        %v1518 = vpop.permute.xlu0 %1517
        %s1520 = sor.u32 256, 16
        %1521 = vbcast.lane.b32.xlu0 %v1511, %s1520
        %v1522 = vpop.permute.xlu0 %1521
        %v1523 = vlaneseq
        %v1524 = vshrl.u32 %v1523, 7
        %v1525 = vsub.s32 7, %v1524
        %v1526 = vrot.slane %v1295, %v1525
        %1528 = vbcast.lane.b32.xlu0 %v1526, 256
        %v1529 = vpop.permute.xlu0 %1528
        %s1531 = sor.u32 256, 8
        %1532 = vbcast.lane.b32.xlu0 %v1526, %s1531
        %v1533 = vpop.permute.xlu0 %1532
        %s1535 = sor.u32 256, 16
        %1536 = vbcast.lane.b32.xlu0 %v1526, %s1535
        %v1537 = vpop.permute.xlu0 %1536
        %v1538 = vmul.f32 %v1304, %v647
        %v1539 = vmul.f32 %v1308, %v648
        %v1540 = vmul.f32 %v1312, %v649
        %v1541 = vmul.f32 %v1319, %v650
        %v1542 = vmul.f32 %v1323, %v651
        %v1543 = vmul.f32 %v1327, %v652
        %v1544 = vmul.f32 %v1334, %v653
        %v1545 = vmul.f32 %v1338, %v654
        %v1546 = vmul.f32 %v1342, %v655
        %v1547 = vmul.f32 %v1349, %v656
        %v1548 = vmul.f32 %v1353, %v657
        %v1549 = vmul.f32 %v1357, %v658
        %v1550 = vmul.f32 %v1364, %v659
        %v1551 = vmul.f32 %v1368, %v660
        %v1552 = vmul.f32 %v1372, %v661
        %v1553 = vmul.f32 %v1379, %v662
        %v1554 = vmul.f32 %v1383, %v663
        %v1555 = vmul.f32 %v1387, %v664
        %v1556 = vmul.f32 %v1394, %v665
        %v1557 = vmul.f32 %v1398, %v666
        %v1558 = vmul.f32 %v1402, %v667
        %v1559 = vmul.f32 %v1409, %v668
        %v1560 = vmul.f32 %v1413, %v669
        %v1561 = vmul.f32 %v1417, %v670
        %v1562 = vmul.f32 %v1424, %v671
        %v1563 = vmul.f32 %v1428, %v672
        %v1564 = vmul.f32 %v1432, %v673
        %v1565 = vmul.f32 %v1439, %v674
        %v1566 = vmul.f32 %v1443, %v675
        %v1567 = vmul.f32 %v1447, %v676
        %v1568 = vmul.f32 %v1454, %v677
        %v1569 = vmul.f32 %v1458, %v678
        %v1570 = vmul.f32 %v1462, %v679
        %v1571 = vmul.f32 %v1469, %v680
        %v1572 = vmul.f32 %v1473, %v681
        %v1573 = vmul.f32 %v1477, %v682
        %v1574 = vmul.f32 %v1484, %v683
        %v1575 = vmul.f32 %v1488, %v684
        %v1576 = vmul.f32 %v1492, %v685
        %v1577 = vmul.f32 %v1499, %v686
        %v1578 = vmul.f32 %v1503, %v687
        %v1579 = vmul.f32 %v1507, %v688
        %v1580 = vmul.f32 %v1514, %v689
        %v1581 = vmul.f32 %v1518, %v690
        %v1582 = vmul.f32 %v1522, %v691
        %v1583 = vmul.f32 %v1529, %v692
        %v1584 = vmul.f32 %v1533, %v693
        %v1585 = vmul.f32 %v1537, %v694
        %v1586 = vsel %vm823, %v1538, 0.0
        %v1587 = vsel %vm823, %v1539, 0.0
        %v1588 = vadd.f32 %v1586, %v1587
        %v1589 = vsel %vm823, %v1540, 0.0
        %v1590 = vadd.f32 %v1588, %v1589
        %v1591 = vrot.slane %v1590, 4
        %v1592 = vadd.f32 %v1590, %v1591
        %v1593 = vrot.slane %v1592, 2
        %v1594 = vadd.f32 %v1592, %v1593
        %v1595 = vrot.slane %v1594, 1
        %v1596 = vadd.f32 %v1594, %v1595
        %v1597 = vsel %vm823, %v1541, 0.0
        %v1598 = vsel %vm823, %v1542, 0.0
        %v1599 = vadd.f32 %v1597, %v1598
        %v1600 = vsel %vm823, %v1543, 0.0
        %v1601 = vadd.f32 %v1599, %v1600
        %v1602 = vrot.slane %v1601, 4
        %v1603 = vadd.f32 %v1601, %v1602
        %v1604 = vrot.slane %v1603, 2
        %v1605 = vadd.f32 %v1603, %v1604
        %v1606 = vrot.slane %v1605, 1
        %v1607 = vadd.f32 %v1605, %v1606
        %v1608 = vsel %vm823, %v1544, 0.0
        %v1609 = vsel %vm823, %v1545, 0.0
        %v1610 = vadd.f32 %v1608, %v1609
        %v1611 = vsel %vm823, %v1546, 0.0
        %v1612 = vadd.f32 %v1610, %v1611
        %v1613 = vrot.slane %v1612, 4
        %v1614 = vadd.f32 %v1612, %v1613
        %v1615 = vrot.slane %v1614, 2
        %v1616 = vadd.f32 %v1614, %v1615
        %v1617 = vrot.slane %v1616, 1
        %v1618 = vadd.f32 %v1616, %v1617
        %v1619 = vsel %vm823, %v1547, 0.0
        %v1620 = vsel %vm823, %v1548, 0.0
        %v1621 = vadd.f32 %v1619, %v1620
        %v1622 = vsel %vm823, %v1549, 0.0
        %v1623 = vadd.f32 %v1621, %v1622
        %v1624 = vrot.slane %v1623, 4
        %v1625 = vadd.f32 %v1623, %v1624
        %v1626 = vrot.slane %v1625, 2
        %v1627 = vadd.f32 %v1625, %v1626
        %v1628 = vrot.slane %v1627, 1
        %v1629 = vadd.f32 %v1627, %v1628
        %v1630 = vsel %vm823, %v1550, 0.0
        %v1631 = vsel %vm823, %v1551, 0.0
        %v1632 = vadd.f32 %v1630, %v1631
        %v1633 = vsel %vm823, %v1552, 0.0
        %v1634 = vadd.f32 %v1632, %v1633
        %v1635 = vrot.slane %v1634, 4
        %v1636 = vadd.f32 %v1634, %v1635
        %v1637 = vrot.slane %v1636, 2
        %v1638 = vadd.f32 %v1636, %v1637
        %v1639 = vrot.slane %v1638, 1
        %v1640 = vadd.f32 %v1638, %v1639
        %v1641 = vsel %vm823, %v1553, 0.0
        %v1642 = vsel %vm823, %v1554, 0.0
        %v1643 = vadd.f32 %v1641, %v1642
        %v1644 = vsel %vm823, %v1555, 0.0
        %v1645 = vadd.f32 %v1643, %v1644
        %v1646 = vrot.slane %v1645, 4
        %v1647 = vadd.f32 %v1645, %v1646
        %v1648 = vrot.slane %v1647, 2
        %v1649 = vadd.f32 %v1647, %v1648
        %v1650 = vrot.slane %v1649, 1
        %v1651 = vadd.f32 %v1649, %v1650
        %v1652 = vsel %vm823, %v1556, 0.0
        %v1653 = vsel %vm823, %v1557, 0.0
        %v1654 = vadd.f32 %v1652, %v1653
        %v1655 = vsel %vm823, %v1558, 0.0
        %v1656 = vadd.f32 %v1654, %v1655
        %v1657 = vrot.slane %v1656, 4
        %v1658 = vadd.f32 %v1656, %v1657
        %v1659 = vrot.slane %v1658, 2
        %v1660 = vadd.f32 %v1658, %v1659
        %v1661 = vrot.slane %v1660, 1
        %v1662 = vadd.f32 %v1660, %v1661
        %v1663 = vsel %vm823, %v1559, 0.0
        %v1664 = vsel %vm823, %v1560, 0.0
        %v1665 = vadd.f32 %v1663, %v1664
        %v1666 = vsel %vm823, %v1561, 0.0
        %v1667 = vadd.f32 %v1665, %v1666
        %v1668 = vrot.slane %v1667, 4
        %v1669 = vadd.f32 %v1667, %v1668
        %v1670 = vrot.slane %v1669, 2
        %v1671 = vadd.f32 %v1669, %v1670
        %v1672 = vrot.slane %v1671, 1
        %v1673 = vadd.f32 %v1671, %v1672
        %v1674 = vsel %vm823, %v1562, 0.0
        %v1675 = vsel %vm823, %v1563, 0.0
        %v1676 = vadd.f32 %v1674, %v1675
        %v1677 = vsel %vm823, %v1564, 0.0
        %v1678 = vadd.f32 %v1676, %v1677
        %v1679 = vrot.slane %v1678, 4
        %v1680 = vadd.f32 %v1678, %v1679
        %v1681 = vrot.slane %v1680, 2
        %v1682 = vadd.f32 %v1680, %v1681
        %v1683 = vrot.slane %v1682, 1
        %v1684 = vadd.f32 %v1682, %v1683
        %v1685 = vsel %vm823, %v1565, 0.0
        %v1686 = vsel %vm823, %v1566, 0.0
        %v1687 = vadd.f32 %v1685, %v1686
        %v1688 = vsel %vm823, %v1567, 0.0
        %v1689 = vadd.f32 %v1687, %v1688
        %v1690 = vrot.slane %v1689, 4
        %v1691 = vadd.f32 %v1689, %v1690
        %v1692 = vrot.slane %v1691, 2
        %v1693 = vadd.f32 %v1691, %v1692
        %v1694 = vrot.slane %v1693, 1
        %v1695 = vadd.f32 %v1693, %v1694
        %v1696 = vsel %vm823, %v1568, 0.0
        %v1697 = vsel %vm823, %v1569, 0.0
        %v1698 = vadd.f32 %v1696, %v1697
        %v1699 = vsel %vm823, %v1570, 0.0
        %v1700 = vadd.f32 %v1698, %v1699
        %v1701 = vrot.slane %v1700, 4
        %v1702 = vadd.f32 %v1700, %v1701
        %v1703 = vrot.slane %v1702, 2
        %v1704 = vadd.f32 %v1702, %v1703
        %v1705 = vrot.slane %v1704, 1
        %v1706 = vadd.f32 %v1704, %v1705
        %v1707 = vsel %vm823, %v1571, 0.0
        %v1708 = vsel %vm823, %v1572, 0.0
        %v1709 = vadd.f32 %v1707, %v1708
        %v1710 = vsel %vm823, %v1573, 0.0
        %v1711 = vadd.f32 %v1709, %v1710
        %v1712 = vrot.slane %v1711, 4
        %v1713 = vadd.f32 %v1711, %v1712
        %v1714 = vrot.slane %v1713, 2
        %v1715 = vadd.f32 %v1713, %v1714
        %v1716 = vrot.slane %v1715, 1
        %v1717 = vadd.f32 %v1715, %v1716
        %v1718 = vsel %vm823, %v1574, 0.0
        %v1719 = vsel %vm823, %v1575, 0.0
        %v1720 = vadd.f32 %v1718, %v1719
        %v1721 = vsel %vm823, %v1576, 0.0
        %v1722 = vadd.f32 %v1720, %v1721
        %v1723 = vrot.slane %v1722, 4
        %v1724 = vadd.f32 %v1722, %v1723
        %v1725 = vrot.slane %v1724, 2
        %v1726 = vadd.f32 %v1724, %v1725
        %v1727 = vrot.slane %v1726, 1
        %v1728 = vadd.f32 %v1726, %v1727
        %v1729 = vsel %vm823, %v1577, 0.0
        %v1730 = vsel %vm823, %v1578, 0.0
        %v1731 = vadd.f32 %v1729, %v1730
        %v1732 = vsel %vm823, %v1579, 0.0
        %v1733 = vadd.f32 %v1731, %v1732
        %v1734 = vrot.slane %v1733, 4
        %v1735 = vadd.f32 %v1733, %v1734
        %v1736 = vrot.slane %v1735, 2
        %v1737 = vadd.f32 %v1735, %v1736
        %v1738 = vrot.slane %v1737, 1
        %v1739 = vadd.f32 %v1737, %v1738
        %v1740 = vsel %vm823, %v1580, 0.0
        %v1741 = vsel %vm823, %v1581, 0.0
        %v1742 = vadd.f32 %v1740, %v1741
        %v1743 = vsel %vm823, %v1582, 0.0
        %v1744 = vadd.f32 %v1742, %v1743
        %v1745 = vrot.slane %v1744, 4
        %v1746 = vadd.f32 %v1744, %v1745
        %v1747 = vrot.slane %v1746, 2
        %v1748 = vadd.f32 %v1746, %v1747
        %v1749 = vrot.slane %v1748, 1
        %v1750 = vadd.f32 %v1748, %v1749
        %v1751 = vsel %vm823, %v1583, 0.0
        %v1752 = vsel %vm823, %v1584, 0.0
        %v1753 = vadd.f32 %v1751, %v1752
        %v1754 = vsel %vm823, %v1585, 0.0
        %v1755 = vadd.f32 %v1753, %v1754
        %v1756 = vrot.slane %v1755, 4
        %v1757 = vadd.f32 %v1755, %v1756
        %v1758 = vrot.slane %v1757, 2
        %v1759 = vadd.f32 %v1757, %v1758
        %v1760 = vrot.slane %v1759, 1
        %v1761 = vadd.f32 %v1759, %v1760
        %v1762 = vpack.c.bf16 %v1596, %v1596
        %v1763 = vpack.c.bf16 %v1607, %v1607
        %v1764 = vpack.c.bf16 %v1618, %v1618
        %v1765 = vpack.c.bf16 %v1629, %v1629
        %v1766 = vpack.c.bf16 %v1640, %v1640
        %v1767 = vpack.c.bf16 %v1651, %v1651
        %v1768 = vpack.c.bf16 %v1662, %v1662
        %v1769 = vpack.c.bf16 %v1673, %v1673
        %v1770 = vpack.c.bf16 %v1684, %v1684
        %v1771 = vpack.c.bf16 %v1695, %v1695
        %v1772 = vpack.c.bf16 %v1706, %v1706
        %v1773 = vpack.c.bf16 %v1717, %v1717
        %v1774 = vpack.c.bf16 %v1728, %v1728
        %v1775 = vpack.c.bf16 %v1739, %v1739
        %v1776 = vpack.c.bf16 %v1750, %v1750
        %v1777 = vpack.c.bf16 %v1761, %v1761
        %v1778 = vld [vmem:[%s4] sm:$0xf]
        %v1779 = vld [vmem:[%s4 + $0x4] sm:$0xf]
        %v1780 = vld [vmem:[%s4 + $0x8] sm:$0xf]
        %v1781 = vld [vmem:[%s4 + $0xc] sm:$0xf]
        %v1782 = vld [vmem:[%s4 + $0x10] sm:$0xf]
        %v1783 = vld [vmem:[%s4 + $0x14] sm:$0xf]
        %v1784 = vld [vmem:[%s4 + $0x18] sm:$0xf]
        %v1785 = vld [vmem:[%s4 + $0x1c] sm:$0xf]
        %v1786 = vld [vmem:[%s5] sm:$0xf]
        %v1787 = vld [vmem:[%s5 + $0x4] sm:$0xf]
        %v1788 = vld [vmem:[%s5 + $0x8] sm:$0xf]
        %v1789 = vld [vmem:[%s5 + $0xc] sm:$0xf]
        %v1794 = vunpack.c.l.b16 %v1786
        %v1795 = vunpack.c.l.b16 %v1787
        %v1796 = vunpack.c.l.b16 %v1788
        %v1797 = vunpack.c.l.b16 %v1789
        %v1798 = vpack.c.b16 %v1795, %v1794
        %v1799 = vpack.c.b16 %v1797, %v1796
        %1802 = vmatprep.subr.bf16.mxu0 0
        %1803 = vmatpush1.bf16.msra.mxu0 %v1798
        %1804 = vmatprep.subr.bf16.mxu0 0
        %1805 = vmatpush1.bf16.msra.mxu0 %v1799
        %1806 = vmatprep.subr.bf16.mxu0 0
        %1807 = vmatpush1.bf16.msra.mxu0 0
        %1808 = vmatprep.subr.bf16.mxu0 0
        %1809 = vmatpush1.bf16.msra.mxu0 0
        %1810 = vmatprep.subr.bf16.mxu0 0
        %1811 = vmatpush1.bf16.msra.mxu0 0
        %1812 = vmatprep.subr.bf16.mxu0 0
        %1813 = vmatpush1.bf16.msra.mxu0 0
        %1814 = vmatprep.subr.bf16.mxu0 0
        %1815 = vmatpush1.bf16.msra.mxu0 0
        %1816 = vmatprep.subr.bf16.mxu0 0
        %1817 = vmatpush1.bf16.msra.mxu0 0
        %1818 = vmatprep.subr.bf16.mxu0 0
        %1819 = vmatpush1.bf16.msra.mxu0 0
        %1820 = vmatprep.subr.bf16.mxu0 0
        %1821 = vmatpush1.bf16.msra.mxu0 0
        %1822 = vmatprep.subr.bf16.mxu0 0
        %1823 = vmatpush1.bf16.msra.mxu0 0
        %1824 = vmatprep.subr.bf16.mxu0 0
        %1825 = vmatpush1.bf16.msra.mxu0 0
        %1826 = vmatprep.subr.bf16.mxu0 0
        %1827 = vmatpush1.bf16.msra.mxu0 0
        %1828 = vmatprep.subr.bf16.mxu0 0
        %1829 = vmatpush1.bf16.msra.mxu0 0
        %1830 = vmatprep.subr.bf16.mxu0 0
        %1831 = vmatpush1.bf16.msra.mxu0 0
        %1832 = vmatprep.subr.bf16.mxu0 0
        %1833 = vmatpush1.bf16.msra.mxu0 0
        %1834 = vmatprep.mubr.bf16.mxu0 0
        %1835 = vmatmul.mubr.bf16.gmra.mrb[0].mxu0 %v504
        %v1836 = vpop.f32.mrb[0].mxu0
        %v1837 = vadd.f32 0.0, %v1836
        %v1838 = vpop.f32.mrb[0].mxu0
        %v1839 = vpop.f32.mrb[0].mxu0
        %v1840 = vadd.f32 0.0, %v1839
        %v1841 = vpop.f32.mrb[0].mxu0
        %1842 = vdwg.mxu0
        %v1859 = vunpack.c.l.b16 %v1762
        %v1860 = vunpack.c.l.b16 %v1763
        %v1861 = vunpack.c.l.b16 %v1764
        %v1862 = vunpack.c.l.b16 %v1765
        %v1863 = vunpack.c.l.b16 %v1766
        %v1864 = vunpack.c.l.b16 %v1767
        %v1865 = vunpack.c.l.b16 %v1768
        %v1866 = vunpack.c.l.b16 %v1769
        %v1867 = vunpack.c.l.b16 %v1770
        %v1868 = vunpack.c.l.b16 %v1771
        %v1869 = vunpack.c.l.b16 %v1772
        %v1870 = vunpack.c.l.b16 %v1773
        %v1871 = vunpack.c.l.b16 %v1774
        %v1872 = vunpack.c.l.b16 %v1775
        %v1873 = vunpack.c.l.b16 %v1776
        %v1874 = vunpack.c.l.b16 %v1777
        %v1875 = vsel %vm1248, %v1860, %v1859
        %v1876 = vsel %vm1250, %v1861, %v1875
        %v1877 = vsel %vm1252, %v1862, %v1876
        %v1878 = vsel %vm1254, %v1863, %v1877
        %v1879 = vsel %vm1256, %v1864, %v1878
        %v1880 = vsel %vm1258, %v1865, %v1879
        %v1881 = vsel %vm1260, %v1866, %v1880
        %v1882 = vsel %vm1248, %v1868, %v1867
        %v1883 = vsel %vm1250, %v1869, %v1882
        %v1884 = vsel %vm1252, %v1870, %v1883
        %v1885 = vsel %vm1254, %v1871, %v1884
        %v1886 = vsel %vm1256, %v1872, %v1885
        %v1887 = vsel %vm1258, %v1873, %v1886
        %v1888 = vsel %vm1260, %v1874, %v1887
        %v1889 = vpack.c.b16 %v1888, %v1881
        %v1898 = vunpack.c.l.b16 %v1778
        %v1899 = vunpack.c.l.b16 %v1779
        %v1900 = vunpack.c.l.b16 %v1780
        %v1901 = vunpack.c.l.b16 %v1781
        %v1902 = vunpack.c.l.b16 %v1782
        %v1903 = vunpack.c.l.b16 %v1783
        %v1904 = vunpack.c.l.b16 %v1784
        %v1905 = vunpack.c.l.b16 %v1785
        %v1906 = vpack.c.b16 %v1899, %v1898
        %v1907 = vpack.c.b16 %v1901, %v1900
        %v1908 = vpack.c.b16 %v1903, %v1902
        %v1909 = vpack.c.b16 %v1905, %v1904
        %v1915 = vsel %vm823, %v1889, 0
        %1917 = vmatprep.subr.bf16.mxu0 0
        %1918 = vmatpush1.bf16.msra.mxu0 %v1906
        %1919 = vmatprep.subr.bf16.mxu0 0
        %1920 = vmatpush1.bf16.msra.mxu0 %v1907
        %1921 = vmatprep.subr.bf16.mxu0 0
        %1922 = vmatpush1.bf16.msra.mxu0 %v1908
        %1923 = vmatprep.subr.bf16.mxu0 0
        %1924 = vmatpush1.bf16.msra.mxu0 %v1909
        %1925 = vmatprep.subr.bf16.mxu0 0
        %1926 = vmatpush1.bf16.msra.mxu0 0
        %1927 = vmatprep.subr.bf16.mxu0 0
        %1928 = vmatpush1.bf16.msra.mxu0 0
        %1929 = vmatprep.subr.bf16.mxu0 0
        %1930 = vmatpush1.bf16.msra.mxu0 0
        %1931 = vmatprep.subr.bf16.mxu0 0
        %1932 = vmatpush1.bf16.msra.mxu0 0
        %1933 = vmatprep.subr.bf16.mxu0 0
        %1934 = vmatpush1.bf16.msra.mxu0 0
        %1935 = vmatprep.subr.bf16.mxu0 0
        %1936 = vmatpush1.bf16.msra.mxu0 0
        %1937 = vmatprep.subr.bf16.mxu0 0
        %1938 = vmatpush1.bf16.msra.mxu0 0
        %1939 = vmatprep.subr.bf16.mxu0 0
        %1940 = vmatpush1.bf16.msra.mxu0 0
        %1941 = vmatprep.subr.bf16.mxu0 0
        %1942 = vmatpush1.bf16.msra.mxu0 0
        %1943 = vmatprep.subr.bf16.mxu0 0
        %1944 = vmatpush1.bf16.msra.mxu0 0
        %1945 = vmatprep.subr.bf16.mxu0 0
        %1946 = vmatpush1.bf16.msra.mxu0 0
        %1947 = vmatprep.subr.bf16.mxu0 0
        %1948 = vmatpush1.bf16.msra.mxu0 0
        %1949 = vmatprep.mubr.bf16.mxu0 0
        %1950 = vmatmul.mubr.bf16.gmra.mrb[0].mxu0 %v1915
        %v1951 = vpop.f32.mrb[0].mxu0
        %v1952 = vadd.f32 %v1837, %v1951
        %v1953 = vpop.f32.mrb[0].mxu0
        %v1954 = vpop.f32.mrb[0].mxu0
        %v1955 = vadd.f32 %v1840, %v1954
        %v1956 = vpop.f32.mrb[0].mxu0
        %1957 = vdwg.mxu0
        %v1958 = vtanh.pop %v1952
        %v1959 = vtanh.pop %v1955
        %1960 = vst.msk [vmem:[%s380] sm:$0xff] %vm502, %v1958
        %1961 = vst.msk [vmem:[%s380 + $0x8] sm:$0xff] %vm502, %v1959
        %s1962 = sand.u32 %s178, 1
        %s1963 = scalar_lea.sflag [#allocation4], %s1962
        %s1964 = sand.u32 %s178, 1
        %s1965 = smul.addr %s1964, 16
        %s1966 = scalar_lea.vmem [#allocation7], %s1965
        %s1967 = sand.u32 %s204, 1
        %s1968 = scalar_lea.sflag [#allocation9], %s1967
        %s1969 = sand.u32 %s204, 1
        %s1970 = smul.addr %s1969, 16
        %s1971 = scalar_lea.vmem [#allocation8], %s1970
        // Predicated region
        $region53: #{tpu_custom_call.1} parent=43 // pred_check
          %p1972 = pneg %p188
        $region54: #{tpu_custom_call.1} parent=43 // pred_check_branch
          %1974 = sbr.rel (%p1972) target = $region56
        $region55: #{tpu_custom_call.1} parent=43 // pred_region
          %s1975 = smul.u32 2, %s29
          %s1976 = ssub.s32 3, %s1975
          %p1977 = scmp.lt.s32.totalorder %s1976, 2
          %s1978 = scalar_select %p1977, %s1976, 2
          %s1979 = smul.u32 128, %s1978
          %s1981 = ssub.s32 256, %s1979
          %1982 = vsyncadd %s1963, %s1981
          %p1983 = scmp.ne.s32.totalorder 0, %s1979
          %s1984 = smul.addr %s1975, 128
          %s1985 = scalar_lea.hbm %s6, %s1984
          %s1986 = smul.u32 8, %s1978
          %s1987 = sshll.u32 %s1966, 4
          %s1988 = int_to_ptr.vmem [resolvable:$true] %s1987
          %s1989 = sshll.u32 %s1986, 4
          %1993 = dma.vmem_to_hbm [thread:$0]  (%p1983), %s1988, %s1989, %s1985, %s1963, 128, 128, 8
        $region56: #{tpu_custom_call.1} parent=43 // pred_fallthru
          _
        // Predicated region
        $region57: #{tpu_custom_call.1} parent=43 // pred_check
          %p1994 = pneg %p214
        $region58: #{tpu_custom_call.1} parent=43 // pred_check_branch
          %1996 = sbr.rel (%p1994) target = $region60
        $region59: #{tpu_custom_call.1} parent=43 // pred_region
          %s1997 = smul.u32 2, %s29
          %s1998 = ssub.s32 3, %s1997
          %p1999 = scmp.lt.s32.totalorder %s1998, 2
          %s2000 = scalar_select %p1999, %s1998, 2
          %s2001 = smul.u32 128, %s2000
          %s2003 = ssub.s32 256, %s2001
          %2004 = vsyncadd %s1968, %s2003
          %p2005 = scmp.ne.s32.totalorder 0, %s2001
          %s2006 = smul.addr %s1997, 128
          %s2007 = scalar_lea.hbm %s7, %s2006
          %s2008 = smul.u32 8, %s2000
          %s2009 = sshll.u32 %s1971, 4
          %s2010 = int_to_ptr.vmem [resolvable:$true] %s2009
          %s2011 = sshll.u32 %s2008, 4
          %2015 = dma.vmem_to_hbm [thread:$0]  (%p2005), %s2010, %s2011, %s2007, %s1968, 128, 128, 8
        $region60: #{tpu_custom_call.1} parent=43 // pred_fallthru
          _
      $region44: #{tpu_custom_call.1} parent=5 // pred_fallthru
        _
      %p2016 = scmp.le.s32.totalorder 2, %s24
      // Predicated region
      $region61: #{tpu_custom_call.1} parent=5 // pred_check
        %p2017 = pneg %p2016
      $region62: #{tpu_custom_call.1} parent=5 // pred_check_branch
        %2019 = sbr.rel (%p2017) target = $region64
      $region63: #{tpu_custom_call.1} parent=5 // pred_region
        %s2020 = ssub.s32 %s24, 2
        // Predicated region
        $region65: #{tpu_custom_call.1} parent=63 // pred_check
          %p2021 = pneg %p194
        $region66: #{tpu_custom_call.1} parent=63 // pred_check_branch
          %2023 = sbr.rel (%p2021) target = $region68
        $region67: #{tpu_custom_call.1} parent=63 // pred_region
          %s2024 = sand.u32 %s179, 1
          %s2025 = scalar_lea.sflag [#allocation4], %s2024
          %s2026 = sand.u32 %s179, 1
          %s2027 = smul.addr %s2026, 16
          %s2028 = scalar_lea.vmem [#allocation7], %s2027
          %2029 = dma.done %s2025, 256
        $region68: #{tpu_custom_call.1} parent=63 // pred_fallthru
          _
        // Predicated region
        $region69: #{tpu_custom_call.1} parent=63 // pred_check
          %p2030 = pneg %p220
        $region70: #{tpu_custom_call.1} parent=63 // pred_check_branch
          %2032 = sbr.rel (%p2030) target = $region72
        $region71: #{tpu_custom_call.1} parent=63 // pred_region
          %s2033 = sand.u32 %s205, 1
          %s2034 = scalar_lea.sflag [#allocation9], %s2033
          %s2035 = sand.u32 %s205, 1
          %s2036 = smul.addr %s2035, 16
          %s2037 = scalar_lea.vmem [#allocation8], %s2036
          %2038 = dma.done %s2034, 256
        $region72: #{tpu_custom_call.1} parent=63 // pred_fallthru
          _
      $region64: #{tpu_custom_call.1} parent=5 // pred_fallthru
        _
    $region6: #{tpu_custom_call.1} parent=1 // loop_footer
      %s28 = sadd.s32 1, %s24
    $region7: #{tpu_custom_call.1} parent=1 // loop_footer_branch
      %23 = sbr.rel target = $region3
    $region8: #{tpu_custom_call.1} parent=1 // loop_exit
      _
    %2039 = vsyncpa [#allocation3], 1
    %s2040 = scalar_lea.sflag [#allocation3], 1
    %2041 = vsyncpa %s2040, 1
    %2042 = vsyncpa [#allocation6], 1
    %2043 = vsyncpa [#allocation4], 1
    %s2044 = scalar_lea.sflag [#allocation4], 1
    %2045 = vsyncpa %s2044, 1
    %2046 = vsyncpa [#allocation9], 1
    %s2047 = scalar_lea.sflag [#allocation9], 1
    %2048 = vsyncpa %s2047, 1

</llo_original>
